<compile_context>
chip_gen: v6e
topology: v6e:2x2x1
jax: 0.10.0
libtpu: 0.0.40
codegen_flags: <defaults>
</compile_context>

<pallas_src>
import jax
import jax.numpy as jnp
import numpy as np
from jax import lax
from jax.experimental import pallas as pl
from jax.experimental.pallas import tpu as pltpu


# ----------------------------------------------------------------------------
# Fused kernel: input projection + LSTM recurrence + online-softmax pooling.
# Gate layout: wrapper reorders PyTorch's gate blocks [i, f, g, o] -> [i, f, o, g]
# so the kernel runs ONE wide sigmoid over [:, :3Hp] and ONE wide tanh over
# [:, 3Hp:] per step; each gate block is a full 128-lane group (Hp = 128k), so
# every slice below is lane-group aligned (no intra-vreg lane shuffles).
# ----------------------------------------------------------------------------
def fused_lstm_attn_kernel(x_ref, len_ref, wih_ref, whh_ref, b_ref, wattn_ref,
                           out_ref, xp_ref):
    T, BT, E = x_ref.shape
    H4 = whh_ref.shape[1]
    Hp = H4 // 4
    H3 = 3 * Hp

    # ---- Phase 1: hoisted input projection (off the serial path) ----------
    x2d = x_ref[...].reshape(T * BT, E).astype(jnp.bfloat16)     # layout-free merge
    xp_ref[...] = (jnp.dot(x2d, wih_ref[...],
                           preferred_element_type=jnp.float32)
                   + b_ref[...])                                  # (T*BT, 4Hp) f32

    whh = whh_ref[...]                      # (Hp, 4Hp) bf16, stays resident
    wattn = wattn_ref[...]                  # (1, Hp)   f32
    lens = len_ref[...]                     # (BT, 1)   int32

    # ---- Phase 2: recurrence + fused online-softmax attention pooling -----
    def step(t, carry):
        h, c, m, l, acc = carry
        row = pl.multiple_of(t * BT, BT)
        gates = xp_ref[pl.ds(row, BT), :] + jnp.dot(
            h.astype(jnp.bfloat16), whh, preferred_element_type=jnp.float32)
        sig = jax.nn.sigmoid(gates[:, :H3])          # i | f | o (one wide EUP op)
        g_g = jnp.tanh(gates[:, H3:])                # g         (one wide EUP op)
        c = sig[:, Hp:2 * Hp] * c + sig[:, :Hp] * g_g
        h = sig[:, 2 * Hp:H3] * jnp.tanh(c)

        # online softmax over time (pad_packed semantics: masked steps give 0)
        mask = (t < lens).astype(jnp.float32)                    # (BT, 1)
        hm = h * mask
        s = jnp.sum(hm * wattn, axis=-1, keepdims=True)          # (BT, 1)
        s = s - (1.0 - mask) * 1e8
        m_new = jnp.maximum(m, s)
        alpha = jnp.exp(m - m_new)
        p = jnp.exp(s - m_new)
        l = alpha * l + p
        acc = alpha * acc + p * hm
        return h, c, m_new, l, acc

    zero_bh = jnp.zeros((BT, Hp), jnp.float32)
    zero_b1 = jnp.zeros((BT, 1), jnp.float32)
    init = (zero_bh, zero_bh, jnp.full((BT, 1), -1e30, jnp.float32),
            zero_b1, zero_bh)
    unroll = True if T <= 16 else 8
    _h, _c, _m, l, acc = lax.fori_loop(0, T, step, init, unroll=unroll)

    # ---- Phase 3: finalize (single multiply, EUP approx reciprocal) --------
    out_ref[...] = acc * pl.reciprocal(l, approx=True)


# ----------------------------------------------------------------------------
# Wrapper (glue: embedding gather, padding, gate reorder/transpose/cast)
# ----------------------------------------------------------------------------
def lstm_attn_forward(padded_sentences, lengths, vocab_embedding,
                      w_ih, w_hh, b_ih, b_hh, w_attn):
    T, B = padded_sentences.shape
    E = vocab_embedding.shape[1]
    H = w_hh.shape[1]

    LANE, SUB = 128, 8
    Hp = ((H + LANE - 1) // LANE) * LANE            # hidden padded to lane multiple
    BT = SUB                                        # batch tile = one f32 sublane tile
    Bp = ((B + BT - 1) // BT) * BT
    nb = Bp // BT

    # embedding lookup (data-dependent gather: left to XLA) + batch padding
    x = jnp.take(vocab_embedding, padded_sentences, axis=0)          # (T, B, E) f32
    x = jnp.pad(x, ((0, 0), (0, Bp - B), (0, 0)))                    # (T, Bp, E)
    lens2d = jnp.pad(lengths.astype(jnp.int32), (0, Bp - B)).reshape(Bp, 1)

    # reorder PyTorch gate blocks [i, f, g, o] -> [i, f, o, g], pad each gate
    # block H -> Hp with zeros (padded hidden units stay exactly 0), transpose,
    # cast MXU operands to bf16 (accumulation stays f32 in the kernel).
    def prep_w(w):                                   # (4H, K) -> (K, 4Hp)
        blocks = [w[0:H], w[H:2 * H], w[3 * H:4 * H], w[2 * H:3 * H]]
        blocks = [jnp.pad(blk, ((0, Hp - H), (0, 0))) for blk in blocks]
        return jnp.concatenate(blocks, axis=0).T

    def prep_b(v):                                   # (4H,) -> (1, 4Hp)
        blocks = [v[0:H], v[H:2 * H], v[3 * H:4 * H], v[2 * H:3 * H]]
        blocks = [jnp.pad(blk, (0, Hp - H)) for blk in blocks]
        return jnp.concatenate(blocks).reshape(1, 4 * Hp)

    w_ih_t = prep_w(w_ih).astype(jnp.bfloat16)                              # (E, 4Hp)
    w_hh_t = jnp.pad(prep_w(w_hh), ((0, Hp - H), (0, 0))).astype(jnp.bfloat16)  # (Hp, 4Hp)
    bias = prep_b(b_ih + b_hh).astype(jnp.float32)                          # (1, 4Hp)
    w_attn_p = jnp.pad(w_attn.reshape(1, H),
                       ((0, 0), (0, Hp - H))).astype(jnp.float32)            # (1, Hp)

    out_p = pl.pallas_call(
        fused_lstm_attn_kernel,
        out_shape=jax.ShapeDtypeStruct((Bp, Hp), jnp.float32),
        grid=(nb,),
        in_specs=[
            pl.BlockSpec((T, BT, E), lambda b: (0, b, 0)),      # x (f32, cast in-kernel)
            pl.BlockSpec((BT, 1), lambda b: (b, 0)),            # lengths (int32)
            pl.BlockSpec((E, 4 * Hp), lambda b: (0, 0)),        # W_ih^T (bf16)
            pl.BlockSpec((Hp, 4 * Hp), lambda b: (0, 0)),       # W_hh^T (bf16)
            pl.BlockSpec((1, 4 * Hp), lambda b: (0, 0)),        # bias (f32)
            pl.BlockSpec((1, Hp), lambda b: (0, 0)),            # attn weight (f32)
        ],
        out_specs=pl.BlockSpec((BT, Hp), lambda b: (b, 0)),
        scratch_shapes=[pltpu.VMEM((T * BT, 4 * Hp), jnp.float32)],   # xproj slab
        compiler_params=pltpu.CompilerParams(
            dimension_semantics=("parallel",)),
    )(x, lens2d, w_ih_t, w_hh_t, bias, w_attn_p)

    return out_p[:B, :H]


# ----------------------------------------------------------------------------
# Pure-JAX reference (lax.scan LSTM + masked attention pooling) for checking.
# ----------------------------------------------------------------------------
def reference(padded_sentences, lengths, vocab_embedding,
              w_ih, w_hh, b_ih, b_hh, w_attn):
    T, B = padded_sentences.shape
    H = w_hh.shape[1]
    x = jnp.take(vocab_embedding, padded_sentences, axis=0)

    def step(carry, x_t):
        h, c = carry
        gates = x_t @ w_ih.T + h @ w_hh.T + b_ih + b_hh
        i_g = jax.nn.sigmoid(gates[:, 0:H])
        f_g = jax.nn.sigmoid(gates[:, H:2 * H])
        g_g = jnp.tanh(gates[:, 2 * H:3 * H])
        o_g = jax.nn.sigmoid(gates[:, 3 * H:4 * H])
        c = f_g * c + i_g * g_g
        h = o_g * jnp.tanh(c)
        return (h, c), h

    h0 = jnp.zeros((B, H), jnp.float32)
    _, outs = lax.scan(step, (h0, h0), x)                       # (T, B, H)
    mask_bt = (jnp.arange(T)[None, :] < lengths[:, None]).astype(jnp.float32)
    outs = outs * mask_bt.T[:, :, None]
    out_bth = jnp.transpose(outs, (1, 0, 2))                    # (B, T, H)
    scores = out_bth @ w_attn.reshape(H, 1)                     # (B, T, 1)
    scores = scores - (1.0 - mask_bt[:, :, None]) * 1e8
    p = jax.nn.softmax(scores, axis=1)
    return jnp.sum(out_bth * p, axis=1)                         # (B, H)


if __name__ == "__main__":
    key = jax.random.PRNGKey(0)
    k_emb, k_tok, k_wih, k_whh, k_bih, k_bhh, k_attn = jax.random.split(key, 7)

    vocab_size, E, H = 50, 32, 32
    B = 4
    lengths = jnp.array([8, 5, 3, 7], dtype=jnp.int32)
    T = int(lengths.max())          # total_length = max(lengths) (static per batch shape)

    vocab_embedding = jax.random.normal(k_emb, (vocab_size, E), jnp.float32) * 0.1
    padded_sentences = jax.random.randint(k_tok, (T, B), 0, vocab_size, jnp.int32)

    s = 1.0 / np.sqrt(H)            # PyTorch LSTM default init range
    w_ih = jax.random.uniform(k_wih, (4 * H, E), jnp.float32, -s, s)
    w_hh = jax.random.uniform(k_whh, (4 * H, H), jnp.float32, -s, s)
    b_ih = jax.random.uniform(k_bih, (4 * H,), jnp.float32, -s, s)
    b_hh = jax.random.uniform(k_bhh, (4 * H,), jnp.float32, -s, s)
    w_attn = jax.random.uniform(k_attn, (1, H), jnp.float32, -s, s)  # AttnEncoder linear

    out = lstm_attn_forward(padded_sentences, lengths, vocab_embedding,
                            w_ih, w_hh, b_ih, b_hh, w_attn)
    out = jax.block_until_ready(out)

    ref = reference(padded_sentences, lengths, vocab_embedding,
                    w_ih, w_hh, b_ih, b_hh, w_attn)
    # tolerance loosened vs the f32 version: MXU operands are bf16 (accumulation f32)
    np.testing.assert_allclose(np.asarray(out), np.asarray(ref), rtol=2e-2, atol=2e-2)

    print("KERNEL_OK")
</pallas_src>

<mosaic_0001>
module attributes {stable_mosaic.version = 11 : i64} {
  func.func @fused_lstm_attn_kernel(%arg0: i32, %arg1: memref<8x8x32xf32, #tpu.memory_space<vmem>>, %arg2: memref<8x1xi32, #tpu.memory_space<vmem>>, %arg3: memref<32x512xbf16, #tpu.memory_space<vmem>>, %arg4: memref<128x512xbf16, #tpu.memory_space<vmem>>, %arg5: memref<1x512xf32, #tpu.memory_space<vmem>>, %arg6: memref<1x128xf32, #tpu.memory_space<vmem>>, %arg7: memref<8x128xf32, #tpu.memory_space<vmem>>, %arg8: memref<64x512xf32, #tpu.memory_space<vmem>>) attributes {dimension_semantics = [#tpu.dimension_semantics<parallel>], iteration_bounds = array<i64: 1>, scalar_prefetch = 0 : i64, scratch_operands = 1 : i64, tpu.core_type = #tpu.core_type<tc>, window_params = [{transform_indices = @transform_0, window_bounds = array<i64: 8, 8, 32>}, {transform_indices = @transform_1, window_bounds = array<i64: 8, 1>}, {pipeline_mode = #tpu.pipeline_mode<synchronous>, transform_indices = @transform_2, window_bounds = array<i64: 32, 512>}, {pipeline_mode = #tpu.pipeline_mode<synchronous>, transform_indices = @transform_3, window_bounds = array<i64: 128, 512>}, {pipeline_mode = #tpu.pipeline_mode<synchronous>, transform_indices = @transform_4, window_bounds = array<i64: 1, 512>}, {pipeline_mode = #tpu.pipeline_mode<synchronous>, transform_indices = @transform_5, window_bounds = array<i64: 1, 128>}, {transform_indices = @transform_6, window_bounds = array<i64: 8, 128>}]} {
    %c0 = arith.constant 0 : index
    %c0_0 = arith.constant 0 : index
    %c0_1 = arith.constant 0 : index
    %0 = vector.load %arg1[%c0, %c0_0, %c0_1] : memref<8x8x32xf32, #tpu.memory_space<vmem>>, vector<8x8x32xf32>
    %1 = vector.shape_cast %0 : vector<8x8x32xf32> to vector<64x32xf32>
    %2 = arith.truncf %1 : vector<64x32xf32> to vector<64x32xbf16>
    %c0_2 = arith.constant 0 : index
    %c0_3 = arith.constant 0 : index
    %3 = vector.load %arg3[%c0_2, %c0_3] : memref<32x512xbf16, #tpu.memory_space<vmem>>, vector<32x512xbf16>
    %cst = arith.constant dense<0.000000e+00> : vector<64x512xf32>
    %4 = tpu.matmul %2, %3, %cst {dimension_numbers = #tpu.dot_dimension_numbers<[1], [0], [0], [1], [0, 0, 1, 1], [], []>} : vector<64x32xbf16>, vector<32x512xbf16>, vector<64x512xf32> -> vector<64x512xf32>
    %c0_4 = arith.constant 0 : index
    %c0_5 = arith.constant 0 : index
    %5 = vector.load %arg5[%c0_4, %c0_5] : memref<1x512xf32, #tpu.memory_space<vmem>>, vector<1x512xf32>
    %6 = vector.broadcast %5 : vector<1x512xf32> to vector<64x512xf32>
    %7 = arith.addf %4, %6 : vector<64x512xf32>
    %c0_6 = arith.constant 0 : index
    %c0_7 = arith.constant 0 : index
    %8 = vector.load %arg8[%c0_6, %c0_7] : memref<64x512xf32, #tpu.memory_space<vmem>>, vector<64x512xf32>
    tpu.vector_store %arg8[%c0_6, %c0_7], %7 {strides = array<i32>} : memref<64x512xf32, #tpu.memory_space<vmem>>, vector<64x512xf32>,
    %c0_8 = arith.constant 0 : index
    %c0_9 = arith.constant 0 : index
    %9 = vector.load %arg4[%c0_8, %c0_9] : memref<128x512xbf16, #tpu.memory_space<vmem>>, vector<128x512xbf16>
    %c0_10 = arith.constant 0 : index
    %c0_11 = arith.constant 0 : index
    %10 = vector.load %arg6[%c0_10, %c0_11] : memref<1x128xf32, #tpu.memory_space<vmem>>, vector<1x128xf32>
    %c0_12 = arith.constant 0 : index
    %c0_13 = arith.constant 0 : index
    %11 = vector.load %arg2[%c0_12, %c0_13] : memref<8x1xi32, #tpu.memory_space<vmem>>, vector<8x1xi32>
    %cst_14 = arith.constant 0.000000e+00 : f32
    %12 = vector.broadcast %cst_14 : f32 to vector<8x128xf32>
    %cst_15 = arith.constant 0.000000e+00 : f32
    %13 = vector.broadcast %cst_15 : f32 to vector<8x1xf32>
    %cst_16 = arith.constant -1.000000e+30 : f32
    %14 = vector.broadcast %cst_16 : f32 to vector<8x1xf32>
    %c0_i32 = arith.constant 0 : i32
    %c8_i32 = arith.constant 8 : i32
    %15 = arith.muli %c0_i32, %c8_i32 : i32
    %16 = tpu.assume_multiple %15, 8 : i32
    %17 = arith.index_cast %16 : i32 to index
    %c0_17 = arith.constant 0 : index
    %18 = vector.load %arg8[%17, %c0_17] : memref<64x512xf32, #tpu.memory_space<vmem>>, vector<8x512xf32>
    %19 = arith.truncf %12 : vector<8x128xf32> to vector<8x128xbf16>
    %cst_18 = arith.constant dense<0.000000e+00> : vector<8x512xf32>
    %20 = tpu.matmul %19, %9, %cst_18 {dimension_numbers = #tpu.dot_dimension_numbers<[1], [0], [0], [1], [0, 0, 1, 1], [], []>} : vector<8x128xbf16>, vector<128x512xbf16>, vector<8x512xf32> -> vector<8x512xf32>
    %21 = arith.addf %18, %20 : vector<8x512xf32>
    %22 = vector.extract_strided_slice %21 {offsets = [0, 0], sizes = [8, 384], strides = [1, 1]} : vector<8x512xf32> to vector<8x384xf32>
    %23 = arith.negf %22 : vector<8x384xf32>
    %24 = math.exp %23 : vector<8x384xf32>
    %cst_19 = arith.constant 1.000000e+00 : f32
    %25 = vector.broadcast %cst_19 : f32 to vector<8x384xf32>
    %26 = arith.addf %25, %24 : vector<8x384xf32>
    %27 = arith.divf %25, %26 : vector<8x384xf32>
    %28 = vector.extract_strided_slice %21 {offsets = [0, 384], sizes = [8, 128], strides = [1, 1]} : vector<8x512xf32> to vector<8x128xf32>
    %29 = math.tanh %28 : vector<8x128xf32>
    %30 = vector.extract_strided_slice %27 {offsets = [0, 128], sizes = [8, 128], strides = [1, 1]} : vector<8x384xf32> to vector<8x128xf32>
    %31 = arith.mulf %30, %12 : vector<8x128xf32>
    %32 = vector.extract_strided_slice %27 {offsets = [0, 0], sizes = [8, 128], strides = [1, 1]} : vector<8x384xf32> to vector<8x128xf32>
    %33 = arith.mulf %32, %29 : vector<8x128xf32>
    %34 = arith.addf %31, %33 : vector<8x128xf32>
    %35 = vector.extract_strided_slice %27 {offsets = [0, 256], sizes = [8, 128], strides = [1, 1]} : vector<8x384xf32> to vector<8x128xf32>
    %36 = math.tanh %34 : vector<8x128xf32>
    %37 = arith.mulf %35, %36 : vector<8x128xf32>
    %38 = vector.broadcast %c0_i32 : i32 to vector<8x1xi32>
    %39 = arith.cmpi slt, %38, %11 : vector<8x1xi32>
    %40 = arith.extui %39 : vector<8x1xi1> to vector<8x1xi32>
    %41 = arith.sitofp %40 : vector<8x1xi32> to vector<8x1xf32>
    %42 = vector.broadcast %41 : vector<8x1xf32> to vector<8x128xf32>
    %43 = arith.mulf %37, %42 : vector<8x128xf32>
    %44 = vector.broadcast %10 : vector<1x128xf32> to vector<8x128xf32>
    %45 = arith.mulf %43, %44 : vector<8x128xf32>
    %cst_20 = arith.constant dense<0.000000e+00> : vector<8xf32>
    %46 = vector.multi_reduction <add>, %45, %cst_20 [1] : vector<8x128xf32> to vector<8xf32>
    %47 = vector.shape_cast %46 : vector<8xf32> to vector<8x1xf32>
    %cst_21 = arith.constant 1.000000e+00 : f32
    %48 = vector.broadcast %cst_21 : f32 to vector<8x1xf32>
    %49 = arith.subf %48, %41 : vector<8x1xf32>
    %cst_22 = arith.constant 1.000000e+08 : f32
    %50 = vector.broadcast %cst_22 : f32 to vector<8x1xf32>
    %51 = arith.mulf %49, %50 : vector<8x1xf32>
    %52 = arith.subf %47, %51 : vector<8x1xf32>
    %53 = arith.maximumf %14, %52 : vector<8x1xf32>
    %54 = arith.subf %14, %53 : vector<8x1xf32>
    %55 = math.exp %54 : vector<8x1xf32>
    %56 = arith.subf %52, %53 : vector<8x1xf32>
    %57 = math.exp %56 : vector<8x1xf32>
    %58 = arith.mulf %55, %13 : vector<8x1xf32>
    %59 = arith.addf %58, %57 : vector<8x1xf32>
    %60 = vector.broadcast %55 : vector<8x1xf32> to vector<8x128xf32>
    %61 = arith.mulf %60, %12 : vector<8x128xf32>
    %62 = vector.broadcast %57 : vector<8x1xf32> to vector<8x128xf32>
    %63 = arith.mulf %62, %43 : vector<8x128xf32>
    %64 = arith.addf %61, %63 : vector<8x128xf32>
    %c1_i32 = arith.constant 1 : i32
    %c8_i32_23 = arith.constant 8 : i32
    %65 = arith.muli %c1_i32, %c8_i32_23 : i32
    %66 = tpu.assume_multiple %65, 8 : i32
    %67 = arith.index_cast %66 : i32 to index
    %c0_24 = arith.constant 0 : index
    %68 = vector.load %arg8[%67, %c0_24] : memref<64x512xf32, #tpu.memory_space<vmem>>, vector<8x512xf32>
    %69 = arith.truncf %37 : vector<8x128xf32> to vector<8x128xbf16>
    %cst_25 = arith.constant dense<0.000000e+00> : vector<8x512xf32>
    %70 = tpu.matmul %69, %9, %cst_25 {dimension_numbers = #tpu.dot_dimension_numbers<[1], [0], [0], [1], [0, 0, 1, 1], [], []>} : vector<8x128xbf16>, vector<128x512xbf16>, vector<8x512xf32> -> vector<8x512xf32>
    %71 = arith.addf %68, %70 : vector<8x512xf32>
    %72 = vector.extract_strided_slice %71 {offsets = [0, 0], sizes = [8, 384], strides = [1, 1]} : vector<8x512xf32> to vector<8x384xf32>
    %73 = arith.negf %72 : vector<8x384xf32>
    %74 = math.exp %73 : vector<8x384xf32>
    %cst_26 = arith.constant 1.000000e+00 : f32
    %75 = vector.broadcast %cst_26 : f32 to vector<8x384xf32>
    %76 = arith.addf %75, %74 : vector<8x384xf32>
    %77 = arith.divf %75, %76 : vector<8x384xf32>
    %78 = vector.extract_strided_slice %71 {offsets = [0, 384], sizes = [8, 128], strides = [1, 1]} : vector<8x512xf32> to vector<8x128xf32>
    %79 = math.tanh %78 : vector<8x128xf32>
    %80 = vector.extract_strided_slice %77 {offsets = [0, 128], sizes = [8, 128], strides = [1, 1]} : vector<8x384xf32> to vector<8x128xf32>
    %81 = arith.mulf %80, %34 : vector<8x128xf32>
    %82 = vector.extract_strided_slice %77 {offsets = [0, 0], sizes = [8, 128], strides = [1, 1]} : vector<8x384xf32> to vector<8x128xf32>
    %83 = arith.mulf %82, %79 : vector<8x128xf32>
    %84 = arith.addf %81, %83 : vector<8x128xf32>
    %85 = vector.extract_strided_slice %77 {offsets = [0, 256], sizes = [8, 128], strides = [1, 1]} : vector<8x384xf32> to vector<8x128xf32>
    %86 = math.tanh %84 : vector<8x128xf32>
    %87 = arith.mulf %85, %86 : vector<8x128xf32>
    %88 = vector.broadcast %c1_i32 : i32 to vector<8x1xi32>
    %89 = arith.cmpi slt, %88, %11 : vector<8x1xi32>
    %90 = arith.extui %89 : vector<8x1xi1> to vector<8x1xi32>
    %91 = arith.sitofp %90 : vector<8x1xi32> to vector<8x1xf32>
    %92 = vector.broadcast %91 : vector<8x1xf32> to vector<8x128xf32>
    %93 = arith.mulf %87, %92 : vector<8x128xf32>
    %94 = vector.broadcast %10 : vector<1x128xf32> to vector<8x128xf32>
    %95 = arith.mulf %93, %94 : vector<8x128xf32>
    %cst_27 = arith.constant dense<0.000000e+00> : vector<8xf32>
    %96 = vector.multi_reduction <add>, %95, %cst_27 [1] : vector<8x128xf32> to vector<8xf32>
    %97 = vector.shape_cast %96 : vector<8xf32> to vector<8x1xf32>
    %cst_28 = arith.constant 1.000000e+00 : f32
    %98 = vector.broadcast %cst_28 : f32 to vector<8x1xf32>
    %99 = arith.subf %98, %91 : vector<8x1xf32>
    %cst_29 = arith.constant 1.000000e+08 : f32
    %100 = vector.broadcast %cst_29 : f32 to vector<8x1xf32>
    %101 = arith.mulf %99, %100 : vector<8x1xf32>
    %102 = arith.subf %97, %101 : vector<8x1xf32>
    %103 = arith.maximumf %53, %102 : vector<8x1xf32>
    %104 = arith.subf %53, %103 : vector<8x1xf32>
    %105 = math.exp %104 : vector<8x1xf32>
    %106 = arith.subf %102, %103 : vector<8x1xf32>
    %107 = math.exp %106 : vector<8x1xf32>
    %108 = arith.mulf %105, %59 : vector<8x1xf32>
    %109 = arith.addf %108, %107 : vector<8x1xf32>
    %110 = vector.broadcast %105 : vector<8x1xf32> to vector<8x128xf32>
    %111 = arith.mulf %110, %64 : vector<8x128xf32>
    %112 = vector.broadcast %107 : vector<8x1xf32> to vector<8x128xf32>
    %113 = arith.mulf %112, %93 : vector<8x128xf32>
    %114 = arith.addf %111, %113 : vector<8x128xf32>
    %c2_i32 = arith.constant 2 : i32
    %c8_i32_30 = arith.constant 8 : i32
    %115 = arith.muli %c2_i32, %c8_i32_30 : i32
    %116 = tpu.assume_multiple %115, 8 : i32
    %117 = arith.index_cast %116 : i32 to index
    %c0_31 = arith.constant 0 : index
    %118 = vector.load %arg8[%117, %c0_31] : memref<64x512xf32, #tpu.memory_space<vmem>>, vector<8x512xf32>
    %119 = arith.truncf %87 : vector<8x128xf32> to vector<8x128xbf16>
    %cst_32 = arith.constant dense<0.000000e+00> : vector<8x512xf32>
    %120 = tpu.matmul %119, %9, %cst_32 {dimension_numbers = #tpu.dot_dimension_numbers<[1], [0], [0], [1], [0, 0, 1, 1], [], []>} : vector<8x128xbf16>, vector<128x512xbf16>, vector<8x512xf32> -> vector<8x512xf32>
    %121 = arith.addf %118, %120 : vector<8x512xf32>
    %122 = vector.extract_strided_slice %121 {offsets = [0, 0], sizes = [8, 384], strides = [1, 1]} : vector<8x512xf32> to vector<8x384xf32>
    %123 = arith.negf %122 : vector<8x384xf32>
    %124 = math.exp %123 : vector<8x384xf32>
    %cst_33 = arith.constant 1.000000e+00 : f32
    %125 = vector.broadcast %cst_33 : f32 to vector<8x384xf32>
    %126 = arith.addf %125, %124 : vector<8x384xf32>
    %127 = arith.divf %125, %126 : vector<8x384xf32>
    %128 = vector.extract_strided_slice %121 {offsets = [0, 384], sizes = [8, 128], strides = [1, 1]} : vector<8x512xf32> to vector<8x128xf32>
    %129 = math.tanh %128 : vector<8x128xf32>
    %130 = vector.extract_strided_slice %127 {offsets = [0, 128], sizes = [8, 128], strides = [1, 1]} : vector<8x384xf32> to vector<8x128xf32>
    %131 = arith.mulf %130, %84 : vector<8x128xf32>
    %132 = vector.extract_strided_slice %127 {offsets = [0, 0], sizes = [8, 128], strides = [1, 1]} : vector<8x384xf32> to vector<8x128xf32>
    %133 = arith.mulf %132, %129 : vector<8x128xf32>
    %134 = arith.addf %131, %133 : vector<8x128xf32>
    %135 = vector.extract_strided_slice %127 {offsets = [0, 256], sizes = [8, 128], strides = [1, 1]} : vector<8x384xf32> to vector<8x128xf32>
    %136 = math.tanh %134 : vector<8x128xf32>
    %137 = arith.mulf %135, %136 : vector<8x128xf32>
    %138 = vector.broadcast %c2_i32 : i32 to vector<8x1xi32>
    %139 = arith.cmpi slt, %138, %11 : vector<8x1xi32>
    %140 = arith.extui %139 : vector<8x1xi1> to vector<8x1xi32>
    %141 = arith.sitofp %140 : vector<8x1xi32> to vector<8x1xf32>
    %142 = vector.broadcast %141 : vector<8x1xf32> to vector<8x128xf32>
    %143 = arith.mulf %137, %142 : vector<8x128xf32>
    %144 = vector.broadcast %10 : vector<1x128xf32> to vector<8x128xf32>
    %145 = arith.mulf %143, %144 : vector<8x128xf32>
    %cst_34 = arith.constant dense<0.000000e+00> : vector<8xf32>
    %146 = vector.multi_reduction <add>, %145, %cst_34 [1] : vector<8x128xf32> to vector<8xf32>
    %147 = vector.shape_cast %146 : vector<8xf32> to vector<8x1xf32>
    %cst_35 = arith.constant 1.000000e+00 : f32
    %148 = vector.broadcast %cst_35 : f32 to vector<8x1xf32>
    %149 = arith.subf %148, %141 : vector<8x1xf32>
    %cst_36 = arith.constant 1.000000e+08 : f32
    %150 = vector.broadcast %cst_36 : f32 to vector<8x1xf32>
    %151 = arith.mulf %149, %150 : vector<8x1xf32>
    %152 = arith.subf %147, %151 : vector<8x1xf32>
    %153 = arith.maximumf %103, %152 : vector<8x1xf32>
    %154 = arith.subf %103, %153 : vector<8x1xf32>
    %155 = math.exp %154 : vector<8x1xf32>
    %156 = arith.subf %152, %153 : vector<8x1xf32>
    %157 = math.exp %156 : vector<8x1xf32>
    %158 = arith.mulf %155, %109 : vector<8x1xf32>
    %159 = arith.addf %158, %157 : vector<8x1xf32>
    %160 = vector.broadcast %155 : vector<8x1xf32> to vector<8x128xf32>
    %161 = arith.mulf %160, %114 : vector<8x128xf32>
    %162 = vector.broadcast %157 : vector<8x1xf32> to vector<8x128xf32>
    %163 = arith.mulf %162, %143 : vector<8x128xf32>
    %164 = arith.addf %161, %163 : vector<8x128xf32>
    %c3_i32 = arith.constant 3 : i32
    %c8_i32_37 = arith.constant 8 : i32
    %165 = arith.muli %c3_i32, %c8_i32_37 : i32
    %166 = tpu.assume_multiple %165, 8 : i32
    %167 = arith.index_cast %166 : i32 to index
    %c0_38 = arith.constant 0 : index
    %168 = vector.load %arg8[%167, %c0_38] : memref<64x512xf32, #tpu.memory_space<vmem>>, vector<8x512xf32>
    %169 = arith.truncf %137 : vector<8x128xf32> to vector<8x128xbf16>
    %cst_39 = arith.constant dense<0.000000e+00> : vector<8x512xf32>
    %170 = tpu.matmul %169, %9, %cst_39 {dimension_numbers = #tpu.dot_dimension_numbers<[1], [0], [0], [1], [0, 0, 1, 1], [], []>} : vector<8x128xbf16>, vector<128x512xbf16>, vector<8x512xf32> -> vector<8x512xf32>
    %171 = arith.addf %168, %170 : vector<8x512xf32>
    %172 = vector.extract_strided_slice %171 {offsets = [0, 0], sizes = [8, 384], strides = [1, 1]} : vector<8x512xf32> to vector<8x384xf32>
    %173 = arith.negf %172 : vector<8x384xf32>
    %174 = math.exp %173 : vector<8x384xf32>
    %cst_40 = arith.constant 1.000000e+00 : f32
    %175 = vector.broadcast %cst_40 : f32 to vector<8x384xf32>
    %176 = arith.addf %175, %174 : vector<8x384xf32>
    %177 = arith.divf %175, %176 : vector<8x384xf32>
    %178 = vector.extract_strided_slice %171 {offsets = [0, 384], sizes = [8, 128], strides = [1, 1]} : vector<8x512xf32> to vector<8x128xf32>
    %179 = math.tanh %178 : vector<8x128xf32>
    %180 = vector.extract_strided_slice %177 {offsets = [0, 128], sizes = [8, 128], strides = [1, 1]} : vector<8x384xf32> to vector<8x128xf32>
    %181 = arith.mulf %180, %134 : vector<8x128xf32>
    %182 = vector.extract_strided_slice %177 {offsets = [0, 0], sizes = [8, 128], strides = [1, 1]} : vector<8x384xf32> to vector<8x128xf32>
    %183 = arith.mulf %182, %179 : vector<8x128xf32>
    %184 = arith.addf %181, %183 : vector<8x128xf32>
    %185 = vector.extract_strided_slice %177 {offsets = [0, 256], sizes = [8, 128], strides = [1, 1]} : vector<8x384xf32> to vector<8x128xf32>
    %186 = math.tanh %184 : vector<8x128xf32>
    %187 = arith.mulf %185, %186 : vector<8x128xf32>
    %188 = vector.broadcast %c3_i32 : i32 to vector<8x1xi32>
    %189 = arith.cmpi slt, %188, %11 : vector<8x1xi32>
    %190 = arith.extui %189 : vector<8x1xi1> to vector<8x1xi32>
    %191 = arith.sitofp %190 : vector<8x1xi32> to vector<8x1xf32>
    %192 = vector.broadcast %191 : vector<8x1xf32> to vector<8x128xf32>
    %193 = arith.mulf %187, %192 : vector<8x128xf32>
    %194 = vector.broadcast %10 : vector<1x128xf32> to vector<8x128xf32>
    %195 = arith.mulf %193, %194 : vector<8x128xf32>
    %cst_41 = arith.constant dense<0.000000e+00> : vector<8xf32>
    %196 = vector.multi_reduction <add>, %195, %cst_41 [1] : vector<8x128xf32> to vector<8xf32>
    %197 = vector.shape_cast %196 : vector<8xf32> to vector<8x1xf32>
    %cst_42 = arith.constant 1.000000e+00 : f32
    %198 = vector.broadcast %cst_42 : f32 to vector<8x1xf32>
    %199 = arith.subf %198, %191 : vector<8x1xf32>
    %cst_43 = arith.constant 1.000000e+08 : f32
    %200 = vector.broadcast %cst_43 : f32 to vector<8x1xf32>
    %201 = arith.mulf %199, %200 : vector<8x1xf32>
    %202 = arith.subf %197, %201 : vector<8x1xf32>
    %203 = arith.maximumf %153, %202 : vector<8x1xf32>
    %204 = arith.subf %153, %203 : vector<8x1xf32>
    %205 = math.exp %204 : vector<8x1xf32>
    %206 = arith.subf %202, %203 : vector<8x1xf32>
    %207 = math.exp %206 : vector<8x1xf32>
    %208 = arith.mulf %205, %159 : vector<8x1xf32>
    %209 = arith.addf %208, %207 : vector<8x1xf32>
    %210 = vector.broadcast %205 : vector<8x1xf32> to vector<8x128xf32>
    %211 = arith.mulf %210, %164 : vector<8x128xf32>
    %212 = vector.broadcast %207 : vector<8x1xf32> to vector<8x128xf32>
    %213 = arith.mulf %212, %193 : vector<8x128xf32>
    %214 = arith.addf %211, %213 : vector<8x128xf32>
    %c4_i32 = arith.constant 4 : i32
    %c8_i32_44 = arith.constant 8 : i32
    %215 = arith.muli %c4_i32, %c8_i32_44 : i32
    %216 = tpu.assume_multiple %215, 8 : i32
    %217 = arith.index_cast %216 : i32 to index
    %c0_45 = arith.constant 0 : index
    %218 = vector.load %arg8[%217, %c0_45] : memref<64x512xf32, #tpu.memory_space<vmem>>, vector<8x512xf32>
    %219 = arith.truncf %187 : vector<8x128xf32> to vector<8x128xbf16>
    %cst_46 = arith.constant dense<0.000000e+00> : vector<8x512xf32>
    %220 = tpu.matmul %219, %9, %cst_46 {dimension_numbers = #tpu.dot_dimension_numbers<[1], [0], [0], [1], [0, 0, 1, 1], [], []>} : vector<8x128xbf16>, vector<128x512xbf16>, vector<8x512xf32> -> vector<8x512xf32>
    %221 = arith.addf %218, %220 : vector<8x512xf32>
    %222 = vector.extract_strided_slice %221 {offsets = [0, 0], sizes = [8, 384], strides = [1, 1]} : vector<8x512xf32> to vector<8x384xf32>
    %223 = arith.negf %222 : vector<8x384xf32>
    %224 = math.exp %223 : vector<8x384xf32>
    %cst_47 = arith.constant 1.000000e+00 : f32
    %225 = vector.broadcast %cst_47 : f32 to vector<8x384xf32>
    %226 = arith.addf %225, %224 : vector<8x384xf32>
    %227 = arith.divf %225, %226 : vector<8x384xf32>
    %228 = vector.extract_strided_slice %221 {offsets = [0, 384], sizes = [8, 128], strides = [1, 1]} : vector<8x512xf32> to vector<8x128xf32>
    %229 = math.tanh %228 : vector<8x128xf32>
    %230 = vector.extract_strided_slice %227 {offsets = [0, 128], sizes = [8, 128], strides = [1, 1]} : vector<8x384xf32> to vector<8x128xf32>
    %231 = arith.mulf %230, %184 : vector<8x128xf32>
    %232 = vector.extract_strided_slice %227 {offsets = [0, 0], sizes = [8, 128], strides = [1, 1]} : vector<8x384xf32> to vector<8x128xf32>
    %233 = arith.mulf %232, %229 : vector<8x128xf32>
    %234 = arith.addf %231, %233 : vector<8x128xf32>
    %235 = vector.extract_strided_slice %227 {offsets = [0, 256], sizes = [8, 128], strides = [1, 1]} : vector<8x384xf32> to vector<8x128xf32>
    %236 = math.tanh %234 : vector<8x128xf32>
    %237 = arith.mulf %235, %236 : vector<8x128xf32>
    %238 = vector.broadcast %c4_i32 : i32 to vector<8x1xi32>
    %239 = arith.cmpi slt, %238, %11 : vector<8x1xi32>
    %240 = arith.extui %239 : vector<8x1xi1> to vector<8x1xi32>
    %241 = arith.sitofp %240 : vector<8x1xi32> to vector<8x1xf32>
    %242 = vector.broadcast %241 : vector<8x1xf32> to vector<8x128xf32>
    %243 = arith.mulf %237, %242 : vector<8x128xf32>
    %244 = vector.broadcast %10 : vector<1x128xf32> to vector<8x128xf32>
    %245 = arith.mulf %243, %244 : vector<8x128xf32>
    %cst_48 = arith.constant dense<0.000000e+00> : vector<8xf32>
    %246 = vector.multi_reduction <add>, %245, %cst_48 [1] : vector<8x128xf32> to vector<8xf32>
    %247 = vector.shape_cast %246 : vector<8xf32> to vector<8x1xf32>
    %cst_49 = arith.constant 1.000000e+00 : f32
    %248 = vector.broadcast %cst_49 : f32 to vector<8x1xf32>
    %249 = arith.subf %248, %241 : vector<8x1xf32>
    %cst_50 = arith.constant 1.000000e+08 : f32
    %250 = vector.broadcast %cst_50 : f32 to vector<8x1xf32>
    %251 = arith.mulf %249, %250 : vector<8x1xf32>
    %252 = arith.subf %247, %251 : vector<8x1xf32>
    %253 = arith.maximumf %203, %252 : vector<8x1xf32>
    %254 = arith.subf %203, %253 : vector<8x1xf32>
    %255 = math.exp %254 : vector<8x1xf32>
    %256 = arith.subf %252, %253 : vector<8x1xf32>
    %257 = math.exp %256 : vector<8x1xf32>
    %258 = arith.mulf %255, %209 : vector<8x1xf32>
    %259 = arith.addf %258, %257 : vector<8x1xf32>
    %260 = vector.broadcast %255 : vector<8x1xf32> to vector<8x128xf32>
    %261 = arith.mulf %260, %214 : vector<8x128xf32>
    %262 = vector.broadcast %257 : vector<8x1xf32> to vector<8x128xf32>
    %263 = arith.mulf %262, %243 : vector<8x128xf32>
    %264 = arith.addf %261, %263 : vector<8x128xf32>
    %c5_i32 = arith.constant 5 : i32
    %c8_i32_51 = arith.constant 8 : i32
    %265 = arith.muli %c5_i32, %c8_i32_51 : i32
    %266 = tpu.assume_multiple %265, 8 : i32
    %267 = arith.index_cast %266 : i32 to index
    %c0_52 = arith.constant 0 : index
    %268 = vector.load %arg8[%267, %c0_52] : memref<64x512xf32, #tpu.memory_space<vmem>>, vector<8x512xf32>
    %269 = arith.truncf %237 : vector<8x128xf32> to vector<8x128xbf16>
    %cst_53 = arith.constant dense<0.000000e+00> : vector<8x512xf32>
    %270 = tpu.matmul %269, %9, %cst_53 {dimension_numbers = #tpu.dot_dimension_numbers<[1], [0], [0], [1], [0, 0, 1, 1], [], []>} : vector<8x128xbf16>, vector<128x512xbf16>, vector<8x512xf32> -> vector<8x512xf32>
    %271 = arith.addf %268, %270 : vector<8x512xf32>
    %272 = vector.extract_strided_slice %271 {offsets = [0, 0], sizes = [8, 384], strides = [1, 1]} : vector<8x512xf32> to vector<8x384xf32>
    %273 = arith.negf %272 : vector<8x384xf32>
    %274 = math.exp %273 : vector<8x384xf32>
    %cst_54 = arith.constant 1.000000e+00 : f32
    %275 = vector.broadcast %cst_54 : f32 to vector<8x384xf32>
    %276 = arith.addf %275, %274 : vector<8x384xf32>
    %277 = arith.divf %275, %276 : vector<8x384xf32>
    %278 = vector.extract_strided_slice %271 {offsets = [0, 384], sizes = [8, 128], strides = [1, 1]} : vector<8x512xf32> to vector<8x128xf32>
    %279 = math.tanh %278 : vector<8x128xf32>
    %280 = vector.extract_strided_slice %277 {offsets = [0, 128], sizes = [8, 128], strides = [1, 1]} : vector<8x384xf32> to vector<8x128xf32>
    %281 = arith.mulf %280, %234 : vector<8x128xf32>
    %282 = vector.extract_strided_slice %277 {offsets = [0, 0], sizes = [8, 128], strides = [1, 1]} : vector<8x384xf32> to vector<8x128xf32>
    %283 = arith.mulf %282, %279 : vector<8x128xf32>
    %284 = arith.addf %281, %283 : vector<8x128xf32>
    %285 = vector.extract_strided_slice %277 {offsets = [0, 256], sizes = [8, 128], strides = [1, 1]} : vector<8x384xf32> to vector<8x128xf32>
    %286 = math.tanh %284 : vector<8x128xf32>
    %287 = arith.mulf %285, %286 : vector<8x128xf32>
    %288 = vector.broadcast %c5_i32 : i32 to vector<8x1xi32>
    %289 = arith.cmpi slt, %288, %11 : vector<8x1xi32>
    %290 = arith.extui %289 : vector<8x1xi1> to vector<8x1xi32>
    %291 = arith.sitofp %290 : vector<8x1xi32> to vector<8x1xf32>
    %292 = vector.broadcast %291 : vector<8x1xf32> to vector<8x128xf32>
    %293 = arith.mulf %287, %292 : vector<8x128xf32>
    %294 = vector.broadcast %10 : vector<1x128xf32> to vector<8x128xf32>
    %295 = arith.mulf %293, %294 : vector<8x128xf32>
    %cst_55 = arith.constant dense<0.000000e+00> : vector<8xf32>
    %296 = vector.multi_reduction <add>, %295, %cst_55 [1] : vector<8x128xf32> to vector<8xf32>
    %297 = vector.shape_cast %296 : vector<8xf32> to vector<8x1xf32>
    %cst_56 = arith.constant 1.000000e+00 : f32
    %298 = vector.broadcast %cst_56 : f32 to vector<8x1xf32>
    %299 = arith.subf %298, %291 : vector<8x1xf32>
    %cst_57 = arith.constant 1.000000e+08 : f32
    %300 = vector.broadcast %cst_57 : f32 to vector<8x1xf32>
    %301 = arith.mulf %299, %300 : vector<8x1xf32>
    %302 = arith.subf %297, %301 : vector<8x1xf32>
    %303 = arith.maximumf %253, %302 : vector<8x1xf32>
    %304 = arith.subf %253, %303 : vector<8x1xf32>
    %305 = math.exp %304 : vector<8x1xf32>
    %306 = arith.subf %302, %303 : vector<8x1xf32>
    %307 = math.exp %306 : vector<8x1xf32>
    %308 = arith.mulf %305, %259 : vector<8x1xf32>
    %309 = arith.addf %308, %307 : vector<8x1xf32>
    %310 = vector.broadcast %305 : vector<8x1xf32> to vector<8x128xf32>
    %311 = arith.mulf %310, %264 : vector<8x128xf32>
    %312 = vector.broadcast %307 : vector<8x1xf32> to vector<8x128xf32>
    %313 = arith.mulf %312, %293 : vector<8x128xf32>
    %314 = arith.addf %311, %313 : vector<8x128xf32>
    %c6_i32 = arith.constant 6 : i32
    %c8_i32_58 = arith.constant 8 : i32
    %315 = arith.muli %c6_i32, %c8_i32_58 : i32
    %316 = tpu.assume_multiple %315, 8 : i32
    %317 = arith.index_cast %316 : i32 to index
    %c0_59 = arith.constant 0 : index
    %318 = vector.load %arg8[%317, %c0_59] : memref<64x512xf32, #tpu.memory_space<vmem>>, vector<8x512xf32>
    %319 = arith.truncf %287 : vector<8x128xf32> to vector<8x128xbf16>
    %cst_60 = arith.constant dense<0.000000e+00> : vector<8x512xf32>
    %320 = tpu.matmul %319, %9, %cst_60 {dimension_numbers = #tpu.dot_dimension_numbers<[1], [0], [0], [1], [0, 0, 1, 1], [], []>} : vector<8x128xbf16>, vector<128x512xbf16>, vector<8x512xf32> -> vector<8x512xf32>
    %321 = arith.addf %318, %320 : vector<8x512xf32>
    %322 = vector.extract_strided_slice %321 {offsets = [0, 0], sizes = [8, 384], strides = [1, 1]} : vector<8x512xf32> to vector<8x384xf32>
    %323 = arith.negf %322 : vector<8x384xf32>
    %324 = math.exp %323 : vector<8x384xf32>
    %cst_61 = arith.constant 1.000000e+00 : f32
    %325 = vector.broadcast %cst_61 : f32 to vector<8x384xf32>
    %326 = arith.addf %325, %324 : vector<8x384xf32>
    %327 = arith.divf %325, %326 : vector<8x384xf32>
    %328 = vector.extract_strided_slice %321 {offsets = [0, 384], sizes = [8, 128], strides = [1, 1]} : vector<8x512xf32> to vector<8x128xf32>
    %329 = math.tanh %328 : vector<8x128xf32>
    %330 = vector.extract_strided_slice %327 {offsets = [0, 128], sizes = [8, 128], strides = [1, 1]} : vector<8x384xf32> to vector<8x128xf32>
    %331 = arith.mulf %330, %284 : vector<8x128xf32>
    %332 = vector.extract_strided_slice %327 {offsets = [0, 0], sizes = [8, 128], strides = [1, 1]} : vector<8x384xf32> to vector<8x128xf32>
    %333 = arith.mulf %332, %329 : vector<8x128xf32>
    %334 = arith.addf %331, %333 : vector<8x128xf32>
    %335 = vector.extract_strided_slice %327 {offsets = [0, 256], sizes = [8, 128], strides = [1, 1]} : vector<8x384xf32> to vector<8x128xf32>
    %336 = math.tanh %334 : vector<8x128xf32>
    %337 = arith.mulf %335, %336 : vector<8x128xf32>
    %338 = vector.broadcast %c6_i32 : i32 to vector<8x1xi32>
    %339 = arith.cmpi slt, %338, %11 : vector<8x1xi32>
    %340 = arith.extui %339 : vector<8x1xi1> to vector<8x1xi32>
    %341 = arith.sitofp %340 : vector<8x1xi32> to vector<8x1xf32>
    %342 = vector.broadcast %341 : vector<8x1xf32> to vector<8x128xf32>
    %343 = arith.mulf %337, %342 : vector<8x128xf32>
    %344 = vector.broadcast %10 : vector<1x128xf32> to vector<8x128xf32>
    %345 = arith.mulf %343, %344 : vector<8x128xf32>
    %cst_62 = arith.constant dense<0.000000e+00> : vector<8xf32>
    %346 = vector.multi_reduction <add>, %345, %cst_62 [1] : vector<8x128xf32> to vector<8xf32>
    %347 = vector.shape_cast %346 : vector<8xf32> to vector<8x1xf32>
    %cst_63 = arith.constant 1.000000e+00 : f32
    %348 = vector.broadcast %cst_63 : f32 to vector<8x1xf32>
    %349 = arith.subf %348, %341 : vector<8x1xf32>
    %cst_64 = arith.constant 1.000000e+08 : f32
    %350 = vector.broadcast %cst_64 : f32 to vector<8x1xf32>
    %351 = arith.mulf %349, %350 : vector<8x1xf32>
    %352 = arith.subf %347, %351 : vector<8x1xf32>
    %353 = arith.maximumf %303, %352 : vector<8x1xf32>
    %354 = arith.subf %303, %353 : vector<8x1xf32>
    %355 = math.exp %354 : vector<8x1xf32>
    %356 = arith.subf %352, %353 : vector<8x1xf32>
    %357 = math.exp %356 : vector<8x1xf32>
    %358 = arith.mulf %355, %309 : vector<8x1xf32>
    %359 = arith.addf %358, %357 : vector<8x1xf32>
    %360 = vector.broadcast %355 : vector<8x1xf32> to vector<8x128xf32>
    %361 = arith.mulf %360, %314 : vector<8x128xf32>
    %362 = vector.broadcast %357 : vector<8x1xf32> to vector<8x128xf32>
    %363 = arith.mulf %362, %343 : vector<8x128xf32>
    %364 = arith.addf %361, %363 : vector<8x128xf32>
    %c7_i32 = arith.constant 7 : i32
    %c8_i32_65 = arith.constant 8 : i32
    %365 = arith.muli %c7_i32, %c8_i32_65 : i32
    %366 = tpu.assume_multiple %365, 8 : i32
    %367 = arith.index_cast %366 : i32 to index
    %c0_66 = arith.constant 0 : index
    %368 = vector.load %arg8[%367, %c0_66] : memref<64x512xf32, #tpu.memory_space<vmem>>, vector<8x512xf32>
    %369 = arith.truncf %337 : vector<8x128xf32> to vector<8x128xbf16>
    %cst_67 = arith.constant dense<0.000000e+00> : vector<8x512xf32>
    %370 = tpu.matmul %369, %9, %cst_67 {dimension_numbers = #tpu.dot_dimension_numbers<[1], [0], [0], [1], [0, 0, 1, 1], [], []>} : vector<8x128xbf16>, vector<128x512xbf16>, vector<8x512xf32> -> vector<8x512xf32>
    %371 = arith.addf %368, %370 : vector<8x512xf32>
    %372 = vector.extract_strided_slice %371 {offsets = [0, 0], sizes = [8, 384], strides = [1, 1]} : vector<8x512xf32> to vector<8x384xf32>
    %373 = arith.negf %372 : vector<8x384xf32>
    %374 = math.exp %373 : vector<8x384xf32>
    %cst_68 = arith.constant 1.000000e+00 : f32
    %375 = vector.broadcast %cst_68 : f32 to vector<8x384xf32>
    %376 = arith.addf %375, %374 : vector<8x384xf32>
    %377 = arith.divf %375, %376 : vector<8x384xf32>
    %378 = vector.extract_strided_slice %371 {offsets = [0, 384], sizes = [8, 128], strides = [1, 1]} : vector<8x512xf32> to vector<8x128xf32>
    %379 = math.tanh %378 : vector<8x128xf32>
    %380 = vector.extract_strided_slice %377 {offsets = [0, 128], sizes = [8, 128], strides = [1, 1]} : vector<8x384xf32> to vector<8x128xf32>
    %381 = arith.mulf %380, %334 : vector<8x128xf32>
    %382 = vector.extract_strided_slice %377 {offsets = [0, 0], sizes = [8, 128], strides = [1, 1]} : vector<8x384xf32> to vector<8x128xf32>
    %383 = arith.mulf %382, %379 : vector<8x128xf32>
    %384 = arith.addf %381, %383 : vector<8x128xf32>
    %385 = vector.extract_strided_slice %377 {offsets = [0, 256], sizes = [8, 128], strides = [1, 1]} : vector<8x384xf32> to vector<8x128xf32>
    %386 = math.tanh %384 : vector<8x128xf32>
    %387 = arith.mulf %385, %386 : vector<8x128xf32>
    %388 = vector.broadcast %c7_i32 : i32 to vector<8x1xi32>
    %389 = arith.cmpi slt, %388, %11 : vector<8x1xi32>
    %390 = arith.extui %389 : vector<8x1xi1> to vector<8x1xi32>
    %391 = arith.sitofp %390 : vector<8x1xi32> to vector<8x1xf32>
    %392 = vector.broadcast %391 : vector<8x1xf32> to vector<8x128xf32>
    %393 = arith.mulf %387, %392 : vector<8x128xf32>
    %394 = vector.broadcast %10 : vector<1x128xf32> to vector<8x128xf32>
    %395 = arith.mulf %393, %394 : vector<8x128xf32>
    %cst_69 = arith.constant dense<0.000000e+00> : vector<8xf32>
    %396 = vector.multi_reduction <add>, %395, %cst_69 [1] : vector<8x128xf32> to vector<8xf32>
    %397 = vector.shape_cast %396 : vector<8xf32> to vector<8x1xf32>
    %cst_70 = arith.constant 1.000000e+00 : f32
    %398 = vector.broadcast %cst_70 : f32 to vector<8x1xf32>
    %399 = arith.subf %398, %391 : vector<8x1xf32>
    %cst_71 = arith.constant 1.000000e+08 : f32
    %400 = vector.broadcast %cst_71 : f32 to vector<8x1xf32>
    %401 = arith.mulf %399, %400 : vector<8x1xf32>
    %402 = arith.subf %397, %401 : vector<8x1xf32>
    %403 = arith.maximumf %353, %402 : vector<8x1xf32>
    %404 = arith.subf %353, %403 : vector<8x1xf32>
    %405 = math.exp %404 : vector<8x1xf32>
    %406 = arith.subf %402, %403 : vector<8x1xf32>
    %407 = math.exp %406 : vector<8x1xf32>
    %408 = arith.mulf %405, %359 : vector<8x1xf32>
    %409 = arith.addf %408, %407 : vector<8x1xf32>
    %410 = vector.broadcast %405 : vector<8x1xf32> to vector<8x128xf32>
    %411 = arith.mulf %410, %364 : vector<8x128xf32>
    %412 = vector.broadcast %407 : vector<8x1xf32> to vector<8x128xf32>
    %413 = arith.mulf %412, %393 : vector<8x128xf32>
    %414 = arith.addf %411, %413 : vector<8x128xf32>
    %c8_i32_72 = arith.constant 8 : i32
    %415 = tpu.reciprocal %409 {approx = true} : vector<8x1xf32> -> vector<8x1xf32>
    %416 = vector.broadcast %415 : vector<8x1xf32> to vector<8x128xf32>
    %417 = arith.mulf %414, %416 : vector<8x128xf32>
    %c0_73 = arith.constant 0 : index
    %c0_74 = arith.constant 0 : index
    %418 = vector.load %arg7[%c0_73, %c0_74] : memref<8x128xf32, #tpu.memory_space<vmem>>, vector<8x128xf32>
    tpu.vector_store %arg7[%c0_73, %c0_74], %417 {strides = array<i32>} : memref<8x128xf32, #tpu.memory_space<vmem>>, vector<8x128xf32>,
    return
  }
  func.func @transform_0(%arg0: i32) -> (i32, i32, i32) {
    %c0_i32 = arith.constant 0 : i32
    %c0_i32_0 = arith.constant 0 : i32
    %c0_i32_1 = arith.constant 0 : i32
    return %c0_i32, %arg0, %c0_i32_0 : i32, i32, i32
  }
  func.func @transform_1(%arg0: i32) -> (i32, i32) {
    %c0_i32 = arith.constant 0 : i32
    %c0_i32_0 = arith.constant 0 : i32
    return %arg0, %c0_i32 : i32, i32
  }
  func.func @transform_2(%arg0: i32) -> (i32, i32) {
    %c0_i32 = arith.constant 0 : i32
    %c0_i32_0 = arith.constant 0 : i32
    %c0_i32_1 = arith.constant 0 : i32
    return %c0_i32, %c0_i32_0 : i32, i32
  }
  func.func @transform_3(%arg0: i32) -> (i32, i32) {
    %c0_i32 = arith.constant 0 : i32
    %c0_i32_0 = arith.constant 0 : i32
    %c0_i32_1 = arith.constant 0 : i32
    return %c0_i32, %c0_i32_0 : i32, i32
  }
  func.func @transform_4(%arg0: i32) -> (i32, i32) {
    %c0_i32 = arith.constant 0 : i32
    %c0_i32_0 = arith.constant 0 : i32
    %c0_i32_1 = arith.constant 0 : i32
    return %c0_i32, %c0_i32_0 : i32, i32
  }
  func.func @transform_5(%arg0: i32) -> (i32, i32) {
    %c0_i32 = arith.constant 0 : i32
    %c0_i32_0 = arith.constant 0 : i32
    %c0_i32_1 = arith.constant 0 : i32
    return %c0_i32, %c0_i32_0 : i32, i32
  }
  func.func @transform_6(%arg0: i32) -> (i32, i32) {
    %c0_i32 = arith.constant 0 : i32
    %c0_i32_0 = arith.constant 0 : i32
    return %arg0, %c0_i32 : i32, i32
  }
}

</mosaic_0001>

<llo_original>
// kernel: tpu_custom_call.1
$region0: #{tpu_custom_call.1}
  #allocation0 [shape = 'u32[]', space=smem, size = 0x4, offset = 0x4, fixed_abs, tag = 'smem constant byte address 0x4 - core index']
  #allocation1 [shape = 'u32[144,128]{1,0:T(1,128)}', space=vmem, size = 0x12000, scoped, tag = 'internal scratch']
  #allocation2 [shape = 'f32[64,512]{1,0:T(8,128)}', space=vmem, size = 0x20000, scoped, tag = 'scratch operand']
  %s0 = inlined_call_operand.hbm [shape: f32[8,8,32], index: 0, kind: input, shape index: {}]
  %s1 = inlined_call_operand.vmem [shape: s32[8,1], index: 1, kind: input, shape index: {}]
  %s2 = inlined_call_operand.hbm [shape: bf16[32,512], index: 2, kind: input, shape index: {}]
  %s3 = inlined_call_operand.hbm [shape: bf16[128,512], index: 3, kind: input, shape index: {}]
  %s4 = inlined_call_operand.vmem [shape: f32[1,512], index: 4, kind: input, shape index: {}]
  %s5 = inlined_call_operand.vmem [shape: f32[1,128], index: 5, kind: input, shape index: {}]
  %s6 = inlined_call_operand.hbm [shape: f32[8,128], index: 6, kind: output, shape index: {}]
  %s7 = sld [smem:[#allocation0]]
  $region46: #{tpu_custom_call.1} parent=0
    _
  %s9 = ssub.s32 1, %s7
  %s10 = scalar_select 0, %s9, %s7
  $region1: #{tpu_custom_call.1} parent=0
    #allocation3 [shape = 'u8[32768]{0}', space=vmem, size = 0x8000, scoped, tag = 'input window, operand 0, single buffered']
    #allocation4 [shape = 's32[1]{0}', space=sflag, size = 0x4, scoped, tag = 'scoped memory for tpu_custom_call.1']
    #allocation5 [shape = 's32[1]{0}', space=sflag, size = 0x4, scoped, tag = 'scoped memory for tpu_custom_call.1']
    #allocation6 [shape = 'u8[32768]{0}', space=vmem, size = 0x8000, scoped, tag = 'input window, operand 2, single buffered']
    #allocation7 [shape = 's32[1]{0}', space=sflag, size = 0x4, scoped, tag = 'scoped memory for tpu_custom_call.1']
    #allocation8 [shape = 'u8[131072]{0}', space=vmem, size = 0x20000, scoped, tag = 'input window, operand 3, single buffered']
    #allocation9 [shape = 'u8[4096]{0}', space=vmem, size = 0x1000, scoped, tag = 'output window, operand 0, single buffered']
    %11 = vsyncpa [#allocation4], 0
    %12 = vsyncpa [#allocation7], 0
    %13 = vsyncpa [#allocation5], 0
    // Predicated region
    $region2: #{tpu_custom_call.1} parent=1 // pred_check
      _
    $region3: #{tpu_custom_call.1} parent=1 // pred_check_branch
      %15 = sbr.rel (0) target = $region5
    $region4: #{tpu_custom_call.1} parent=1 // pred_region
      %s17 = ssub.s32 1024, 1024
      %18 = vsyncadd [#allocation4], %s17
      %s19 = sshll.u32 [#allocation3], 4
      %s20 = int_to_ptr.vmem [resolvable:$true] %s19
      %25 = dma.hbm_to_vmem [thread:$0]  %s0, 1024, %s20, [#allocation4], 128, 128, 8
    $region5: #{tpu_custom_call.1} parent=1 // pred_fallthru
      _
    // Predicated region
    $region6: #{tpu_custom_call.1} parent=1 // pred_check
      _
    $region7: #{tpu_custom_call.1} parent=1 // pred_check_branch
      %27 = sbr.rel (0) target = $region9
    $region8: #{tpu_custom_call.1} parent=1 // pred_region
      _
    $region9: #{tpu_custom_call.1} parent=1 // pred_fallthru
      _
    // Predicated region
    $region10: #{tpu_custom_call.1} parent=1 // pred_check
      _
    $region11: #{tpu_custom_call.1} parent=1 // pred_check_branch
      %29 = sbr.rel (0) target = $region13
    $region12: #{tpu_custom_call.1} parent=1 // pred_region
      %s31 = ssub.s32 1024, 1024
      %32 = vsyncadd [#allocation7], %s31
      %s33 = sshll.u32 [#allocation6], 4
      %s34 = int_to_ptr.vmem [resolvable:$true] %s33
      %39 = dma.hbm_to_vmem [thread:$0]  %s2, 1024, %s34, [#allocation7], 256, 256, 16
    $region13: #{tpu_custom_call.1} parent=1 // pred_fallthru
      _
    // Predicated region
    $region14: #{tpu_custom_call.1} parent=1 // pred_check
      _
    $region15: #{tpu_custom_call.1} parent=1 // pred_check_branch
      %41 = sbr.rel (0) target = $region17
    $region16: #{tpu_custom_call.1} parent=1 // pred_region
      %s43 = ssub.s32 4096, 4096
      %44 = vsyncadd [#allocation7], %s43
      %s45 = sshll.u32 [#allocation8], 4
      %s46 = int_to_ptr.vmem [resolvable:$true] %s45
      %51 = dma.hbm_to_vmem [thread:$0]  %s3, 4096, %s46, [#allocation7], 256, 256, 16
    $region17: #{tpu_custom_call.1} parent=1 // pred_fallthru
      _
    // Predicated region
    $region18: #{tpu_custom_call.1} parent=1 // pred_check
      _
    $region19: #{tpu_custom_call.1} parent=1 // pred_check_branch
      %53 = sbr.rel (0) target = $region21
    $region20: #{tpu_custom_call.1} parent=1 // pred_region
      _
    $region21: #{tpu_custom_call.1} parent=1 // pred_fallthru
      _
    // Predicated region
    $region22: #{tpu_custom_call.1} parent=1 // pred_check
      _
    $region23: #{tpu_custom_call.1} parent=1 // pred_check_branch
      %55 = sbr.rel (0) target = $region25
    $region24: #{tpu_custom_call.1} parent=1 // pred_region
      _
    $region25: #{tpu_custom_call.1} parent=1 // pred_fallthru
      _
    // Predicated region
    $region26: #{tpu_custom_call.1} parent=1 // pred_check
      _
    $region27: #{tpu_custom_call.1} parent=1 // pred_check_branch
      %57 = sbr.rel (0) target = $region29
    $region28: #{tpu_custom_call.1} parent=1 // pred_region
      %58 = dma.done [#allocation4], 1024
    $region29: #{tpu_custom_call.1} parent=1 // pred_fallthru
      _
    // Predicated region
    $region30: #{tpu_custom_call.1} parent=1 // pred_check
      _
    $region31: #{tpu_custom_call.1} parent=1 // pred_check_branch
      %60 = sbr.rel (0) target = $region33
    $region32: #{tpu_custom_call.1} parent=1 // pred_region
      %61 = dma.done [#allocation7], 1024
    $region33: #{tpu_custom_call.1} parent=1 // pred_fallthru
      _
    // Predicated region
    $region34: #{tpu_custom_call.1} parent=1 // pred_check
      _
    $region35: #{tpu_custom_call.1} parent=1 // pred_check_branch
      %63 = sbr.rel (0) target = $region37
    $region36: #{tpu_custom_call.1} parent=1 // pred_region
      %64 = dma.done [#allocation7], 4096
    $region37: #{tpu_custom_call.1} parent=1 // pred_fallthru
      _
    %v66 = vld [vmem:[#allocation3] sm:$0xff]
    %v67 = vld [vmem:[#allocation3 + $0x8] sm:$0xff]
    %v68 = vld [vmem:[#allocation3 + $0x10] sm:$0xff]
    %v69 = vld [vmem:[#allocation3 + $0x18] sm:$0xff]
    %v70 = vld [vmem:[#allocation3 + $0x20] sm:$0xff]
    %v71 = vld [vmem:[#allocation3 + $0x28] sm:$0xff]
    %v72 = vld [vmem:[#allocation3 + $0x30] sm:$0xff]
    %v73 = vld [vmem:[#allocation3 + $0x38] sm:$0xff]
    %v74 = vpack.c.bf16 %v67, %v66
    %v75 = vpack.c.bf16 %v69, %v68
    %v76 = vpack.c.bf16 %v71, %v70
    %v77 = vpack.c.bf16 %v73, %v72
    %v78 = vld [vmem:[#allocation6] sm:$0xff]
    %v79 = vld [vmem:[#allocation6 + $0x8] sm:$0xff]
    %v80 = vld [vmem:[#allocation6 + $0x10] sm:$0xff]
    %v81 = vld [vmem:[#allocation6 + $0x18] sm:$0xff]
    %v82 = vld [vmem:[#allocation6 + $0x20] sm:$0xff]
    %v83 = vld [vmem:[#allocation6 + $0x28] sm:$0xff]
    %v84 = vld [vmem:[#allocation6 + $0x30] sm:$0xff]
    %v85 = vld [vmem:[#allocation6 + $0x38] sm:$0xff]
    %v86 = vld [vmem:[%s4] sm:$0xf]
    %v88 = vlaneseq
    %v89 = vshrl.u32 %v88, 7
    %v90 = vsub.s32 0, %v89
    %v91 = vrot.slane %v86, %v90
    %v92 = vlaneseq
    %v93 = vshrl.u32 %v92, 7
    %v94 = vsub.s32 1, %v93
    %v95 = vrot.slane %v86, %v94
    %v96 = vlaneseq
    %v97 = vshrl.u32 %v96, 7
    %v98 = vsub.s32 2, %v97
    %v99 = vrot.slane %v86, %v98
    %v100 = vlaneseq
    %v101 = vshrl.u32 %v100, 7
    %v102 = vsub.s32 3, %v101
    %v103 = vrot.slane %v86, %v102
    %v116 = vunpack.c.l.b16 %v78
    %v117 = vunpack.c.h.b16 %v78
    %v118 = vunpack.c.l.b16 %v79
    %v119 = vunpack.c.h.b16 %v79
    %v120 = vunpack.c.l.b16 %v80
    %v121 = vunpack.c.h.b16 %v80
    %v122 = vunpack.c.l.b16 %v81
    %v123 = vunpack.c.h.b16 %v81
    %v124 = vunpack.c.l.b16 %v82
    %v125 = vunpack.c.h.b16 %v82
    %v126 = vunpack.c.l.b16 %v83
    %v127 = vunpack.c.h.b16 %v83
    %v128 = vunpack.c.l.b16 %v84
    %v129 = vunpack.c.h.b16 %v84
    %v130 = vunpack.c.l.b16 %v85
    %v131 = vunpack.c.h.b16 %v85
    %v132 = vpack.c.b16 %v120, %v116
    %v133 = vpack.c.b16 %v121, %v117
    %v134 = vpack.c.b16 %v122, %v118
    %v135 = vpack.c.b16 %v123, %v119
    %v136 = vpack.c.b16 %v128, %v124
    %v137 = vpack.c.b16 %v129, %v125
    %v138 = vpack.c.b16 %v130, %v126
    %v139 = vpack.c.b16 %v131, %v127
    %vm148 = vcmask 261120
    %v150 = vsel %vm148, %v74, 0
    %v153 = vsel %vm148, %v75, 0
    %v156 = vsel %vm148, %v76, 0
    %v159 = vsel %vm148, %v77, 0
    %161 = vmatprep.subr.bf16.mxu0 0
    %162 = vmatpush1.bf16.msra.mxu0 0
    %163 = vmatprep.subr.bf16.mxu0 0
    %164 = vmatpush1.bf16.msra.mxu0 0
    %165 = vmatprep.subr.bf16.mxu0 0
    %166 = vmatpush1.bf16.msra.mxu0 0
    %167 = vmatprep.subr.bf16.mxu0 0
    %168 = vmatpush1.bf16.msra.mxu0 0
    %169 = vmatprep.subr.bf16.mxu0 0
    %170 = vmatpush1.bf16.msra.mxu0 0
    %171 = vmatprep.subr.bf16.mxu0 0
    %172 = vmatpush1.bf16.msra.mxu0 0
    %173 = vmatprep.subr.bf16.mxu0 %v137
    %174 = vmatpush1.bf16.msra.mxu0 %v136
    %175 = vmatprep.subr.bf16.mxu0 %v133
    %176 = vmatpush1.bf16.msra.mxu0 %v132
    %177 = vmatprep.subr.bf16.mxu0 0
    %178 = vmatpush2.bf16.msra.mxu0 0
    %179 = vmatprep.subr.bf16.mxu0 0
    %180 = vmatpush2.bf16.msra.mxu0 0
    %181 = vmatprep.subr.bf16.mxu0 0
    %182 = vmatpush2.bf16.msra.mxu0 0
    %183 = vmatprep.subr.bf16.mxu0 0
    %184 = vmatpush2.bf16.msra.mxu0 0
    %185 = vmatprep.subr.bf16.mxu0 0
    %186 = vmatpush2.bf16.msra.mxu0 0
    %187 = vmatprep.subr.bf16.mxu0 0
    %188 = vmatpush2.bf16.msra.mxu0 0
    %189 = vmatprep.subr.bf16.mxu0 0
    %190 = vmatpush2.bf16.msra.mxu0 0
    %191 = vmatprep.subr.bf16.mxu0 0
    %192 = vmatpush2.bf16.msra.mxu0 0
    %193 = vmatprep.mubr.bf16.mxu0 0
    %194 = vmatmul.mubr.bf16.gmra.mxu0 %v150
    %v195 = vpop.f32.mrf.mxu0
    %v196 = vadd.f32 %v91, %v195
    %v197 = vpop.f32.mrf.mxu0
    %v198 = vadd.f32 %v95, %v197
    %v199 = vpop.f32.mrf.mxu0
    %v200 = vadd.f32 %v91, %v199
    %v201 = vpop.f32.mrf.mxu0
    %v202 = vadd.f32 %v95, %v201
    %203 = vmatprep.mubr.bf16.mxu0 0
    %204 = vmatmul.mubr.bf16.gmra.mxu0 %v153
    %v205 = vpop.f32.mrf.mxu0
    %v206 = vadd.f32 %v91, %v205
    %v207 = vpop.f32.mrf.mxu0
    %v208 = vadd.f32 %v95, %v207
    %v209 = vpop.f32.mrf.mxu0
    %v210 = vadd.f32 %v91, %v209
    %v211 = vpop.f32.mrf.mxu0
    %v212 = vadd.f32 %v95, %v211
    %213 = vmatprep.mubr.bf16.mxu0 0
    %214 = vmatmul.mubr.bf16.gmra.mxu0 %v156
    %v215 = vpop.f32.mrf.mxu0
    %v216 = vadd.f32 %v91, %v215
    %v217 = vpop.f32.mrf.mxu0
    %v218 = vadd.f32 %v95, %v217
    %v219 = vpop.f32.mrf.mxu0
    %v220 = vadd.f32 %v91, %v219
    %v221 = vpop.f32.mrf.mxu0
    %v222 = vadd.f32 %v95, %v221
    %223 = vmatprep.mubr.bf16.mxu0 0
    %224 = vmatmul.mubr.bf16.gmra.mxu0 %v159
    %v225 = vpop.f32.mrf.mxu0
    %v226 = vadd.f32 %v91, %v225
    %v227 = vpop.f32.mrf.mxu0
    %v228 = vadd.f32 %v95, %v227
    %v229 = vpop.f32.mrf.mxu0
    %v230 = vadd.f32 %v91, %v229
    %v231 = vpop.f32.mrf.mxu0
    %v232 = vadd.f32 %v95, %v231
    %233 = vdwg.mxu0
    %234 = vmatprep.subr.bf16.mxu0 0
    %235 = vmatpush1.bf16.msra.mxu0 0
    %236 = vmatprep.subr.bf16.mxu0 0
    %237 = vmatpush1.bf16.msra.mxu0 0
    %238 = vmatprep.subr.bf16.mxu0 0
    %239 = vmatpush1.bf16.msra.mxu0 0
    %240 = vmatprep.subr.bf16.mxu0 0
    %241 = vmatpush1.bf16.msra.mxu0 0
    %242 = vmatprep.subr.bf16.mxu0 0
    %243 = vmatpush1.bf16.msra.mxu0 0
    %244 = vmatprep.subr.bf16.mxu0 0
    %245 = vmatpush1.bf16.msra.mxu0 0
    %246 = vmatprep.subr.bf16.mxu0 %v139
    %247 = vmatpush1.bf16.msra.mxu0 %v138
    %248 = vmatprep.subr.bf16.mxu0 %v135
    %249 = vmatpush1.bf16.msra.mxu0 %v134
    %250 = vmatprep.subr.bf16.mxu0 0
    %251 = vmatpush2.bf16.msra.mxu0 0
    %252 = vmatprep.subr.bf16.mxu0 0
    %253 = vmatpush2.bf16.msra.mxu0 0
    %254 = vmatprep.subr.bf16.mxu0 0
    %255 = vmatpush2.bf16.msra.mxu0 0
    %256 = vmatprep.subr.bf16.mxu0 0
    %257 = vmatpush2.bf16.msra.mxu0 0
    %258 = vmatprep.subr.bf16.mxu0 0
    %259 = vmatpush2.bf16.msra.mxu0 0
    %260 = vmatprep.subr.bf16.mxu0 0
    %261 = vmatpush2.bf16.msra.mxu0 0
    %262 = vmatprep.subr.bf16.mxu0 0
    %263 = vmatpush2.bf16.msra.mxu0 0
    %264 = vmatprep.subr.bf16.mxu0 0
    %265 = vmatpush2.bf16.msra.mxu0 0
    %266 = vmatprep.mubr.bf16.mxu0 0
    %267 = vmatmul.mubr.bf16.gmra.mxu0 %v150
    %v268 = vpop.f32.mrf.mxu0
    %v269 = vadd.f32 %v99, %v268
    %v270 = vpop.f32.mrf.mxu0
    %v271 = vadd.f32 %v103, %v270
    %v272 = vpop.f32.mrf.mxu0
    %v273 = vadd.f32 %v99, %v272
    %v274 = vpop.f32.mrf.mxu0
    %v275 = vadd.f32 %v103, %v274
    %276 = vmatprep.mubr.bf16.mxu0 0
    %277 = vmatmul.mubr.bf16.gmra.mxu0 %v153
    %v278 = vpop.f32.mrf.mxu0
    %v279 = vadd.f32 %v99, %v278
    %v280 = vpop.f32.mrf.mxu0
    %v281 = vadd.f32 %v103, %v280
    %v282 = vpop.f32.mrf.mxu0
    %v283 = vadd.f32 %v99, %v282
    %v284 = vpop.f32.mrf.mxu0
    %v285 = vadd.f32 %v103, %v284
    %286 = vmatprep.mubr.bf16.mxu0 0
    %287 = vmatmul.mubr.bf16.gmra.mxu0 %v156
    %v288 = vpop.f32.mrf.mxu0
    %v289 = vadd.f32 %v99, %v288
    %v290 = vpop.f32.mrf.mxu0
    %v291 = vadd.f32 %v103, %v290
    %v292 = vpop.f32.mrf.mxu0
    %v293 = vadd.f32 %v99, %v292
    %v294 = vpop.f32.mrf.mxu0
    %v295 = vadd.f32 %v103, %v294
    %296 = vmatprep.mubr.bf16.mxu0 0
    %297 = vmatmul.mubr.bf16.gmra.mxu0 %v159
    %v298 = vpop.f32.mrf.mxu0
    %v299 = vadd.f32 %v99, %v298
    %v300 = vpop.f32.mrf.mxu0
    %v301 = vadd.f32 %v103, %v300
    %v302 = vpop.f32.mrf.mxu0
    %v303 = vadd.f32 %v99, %v302
    %v304 = vpop.f32.mrf.mxu0
    %v305 = vadd.f32 %v103, %v304
    %306 = vdwg.mxu0
    %307 = vst [vmem:[#allocation2] sm:$0xff] %v196
    %308 = vst [vmem:[#allocation2 + $0x8] sm:$0xff] %v198
    %309 = vst [vmem:[#allocation2 + $0x10] sm:$0xff] %v269
    %310 = vst [vmem:[#allocation2 + $0x18] sm:$0xff] %v271
    %311 = vst [vmem:[#allocation2 + $0x20] sm:$0xff] %v200
    %312 = vst [vmem:[#allocation2 + $0x28] sm:$0xff] %v202
    %313 = vst [vmem:[#allocation2 + $0x30] sm:$0xff] %v273
    %314 = vst [vmem:[#allocation2 + $0x38] sm:$0xff] %v275
    %315 = vst [vmem:[#allocation2 + $0x40] sm:$0xff] %v206
    %316 = vst [vmem:[#allocation2 + $0x48] sm:$0xff] %v208
    %317 = vst [vmem:[#allocation2 + $0x50] sm:$0xff] %v279
    %318 = vst [vmem:[#allocation2 + $0x58] sm:$0xff] %v281
    %319 = vst [vmem:[#allocation2 + $0x60] sm:$0xff] %v210
    %320 = vst [vmem:[#allocation2 + $0x68] sm:$0xff] %v212
    %321 = vst [vmem:[#allocation2 + $0x70] sm:$0xff] %v283
    %322 = vst [vmem:[#allocation2 + $0x78] sm:$0xff] %v285
    %323 = vst [vmem:[#allocation2 + $0x80] sm:$0xff] %v216
    %324 = vst [vmem:[#allocation2 + $0x88] sm:$0xff] %v218
    %325 = vst [vmem:[#allocation2 + $0x90] sm:$0xff] %v289
    %326 = vst [vmem:[#allocation2 + $0x98] sm:$0xff] %v291
    %327 = vst [vmem:[#allocation2 + $0xa0] sm:$0xff] %v220
    %328 = vst [vmem:[#allocation2 + $0xa8] sm:$0xff] %v222
    %329 = vst [vmem:[#allocation2 + $0xb0] sm:$0xff] %v293
    %330 = vst [vmem:[#allocation2 + $0xb8] sm:$0xff] %v295
    %331 = vst [vmem:[#allocation2 + $0xc0] sm:$0xff] %v226
    %332 = vst [vmem:[#allocation2 + $0xc8] sm:$0xff] %v228
    %333 = vst [vmem:[#allocation2 + $0xd0] sm:$0xff] %v299
    %334 = vst [vmem:[#allocation2 + $0xd8] sm:$0xff] %v301
    %335 = vst [vmem:[#allocation2 + $0xe0] sm:$0xff] %v230
    %336 = vst [vmem:[#allocation2 + $0xe8] sm:$0xff] %v232
    %337 = vst [vmem:[#allocation2 + $0xf0] sm:$0xff] %v303
    %338 = vst [vmem:[#allocation2 + $0xf8] sm:$0xff] %v305
    %v339 = vld [vmem:[#allocation8] sm:$0xff]
    %v340 = vld [vmem:[#allocation8 + $0x8] sm:$0xff]
    %v341 = vld [vmem:[#allocation8 + $0x10] sm:$0xff]
    %v342 = vld [vmem:[#allocation8 + $0x18] sm:$0xff]
    %v343 = vld [vmem:[#allocation8 + $0x20] sm:$0xff]
    %v344 = vld [vmem:[#allocation8 + $0x28] sm:$0xff]
    %v345 = vld [vmem:[#allocation8 + $0x30] sm:$0xff]
    %v346 = vld [vmem:[#allocation8 + $0x38] sm:$0xff]
    %v347 = vld [vmem:[#allocation8 + $0x40] sm:$0xff]
    %v348 = vld [vmem:[#allocation8 + $0x48] sm:$0xff]
    %v349 = vld [vmem:[#allocation8 + $0x50] sm:$0xff]
    %v350 = vld [vmem:[#allocation8 + $0x58] sm:$0xff]
    %v351 = vld [vmem:[#allocation8 + $0x60] sm:$0xff]
    %v352 = vld [vmem:[#allocation8 + $0x68] sm:$0xff]
    %v353 = vld [vmem:[#allocation8 + $0x70] sm:$0xff]
    %v354 = vld [vmem:[#allocation8 + $0x78] sm:$0xff]
    %v355 = vld [vmem:[#allocation8 + $0x80] sm:$0xff]
    %v356 = vld [vmem:[#allocation8 + $0x88] sm:$0xff]
    %v357 = vld [vmem:[#allocation8 + $0x90] sm:$0xff]
    %v358 = vld [vmem:[#allocation8 + $0x98] sm:$0xff]
    %v359 = vld [vmem:[#allocation8 + $0xa0] sm:$0xff]
    %v360 = vld [vmem:[#allocation8 + $0xa8] sm:$0xff]
    %v361 = vld [vmem:[#allocation8 + $0xb0] sm:$0xff]
    %v362 = vld [vmem:[#allocation8 + $0xb8] sm:$0xff]
    %v363 = vld [vmem:[#allocation8 + $0xc0] sm:$0xff]
    %v364 = vld [vmem:[#allocation8 + $0xc8] sm:$0xff]
    %v365 = vld [vmem:[#allocation8 + $0xd0] sm:$0xff]
    %v366 = vld [vmem:[#allocation8 + $0xd8] sm:$0xff]
    %v367 = vld [vmem:[#allocation8 + $0xe0] sm:$0xff]
    %v368 = vld [vmem:[#allocation8 + $0xe8] sm:$0xff]
    %v369 = vld [vmem:[#allocation8 + $0xf0] sm:$0xff]
    %v370 = vld [vmem:[#allocation8 + $0xf8] sm:$0xff]
    %v371 = vld [vmem:[%s5] sm:$0x1]
    %v372 = vld [vmem:[%s1] sm:$0xff]
    %s373 = smul.u32 0, 4
    %s374 = smul.addr %s373, 8
    %s375 = scalar_lea.vmem [#allocation2], %s374
    %v376 = vld [vmem:[%s375] sm:$0xff]
    %v377 = vld [vmem:[%s375 + $0x8] sm:$0xff]
    %v378 = vld [vmem:[%s375 + $0x10] sm:$0xff]
    %v379 = vld [vmem:[%s375 + $0x18] sm:$0xff]
    %v412 = vunpack.c.l.b16 %v339
    %v413 = vunpack.c.h.b16 %v339
    %v414 = vunpack.c.l.b16 %v340
    %v415 = vunpack.c.h.b16 %v340
    %v416 = vunpack.c.l.b16 %v341
    %v417 = vunpack.c.h.b16 %v341
    %v418 = vunpack.c.l.b16 %v342
    %v419 = vunpack.c.h.b16 %v342
    %v420 = vunpack.c.l.b16 %v343
    %v421 = vunpack.c.h.b16 %v343
    %v422 = vunpack.c.l.b16 %v344
    %v423 = vunpack.c.h.b16 %v344
    %v424 = vunpack.c.l.b16 %v345
    %v425 = vunpack.c.h.b16 %v345
    %v426 = vunpack.c.l.b16 %v346
    %v427 = vunpack.c.h.b16 %v346
    %v428 = vunpack.c.l.b16 %v347
    %v429 = vunpack.c.h.b16 %v347
    %v430 = vunpack.c.l.b16 %v348
    %v431 = vunpack.c.h.b16 %v348
    %v432 = vunpack.c.l.b16 %v349
    %v433 = vunpack.c.h.b16 %v349
    %v434 = vunpack.c.l.b16 %v350
    %v435 = vunpack.c.h.b16 %v350
    %v436 = vunpack.c.l.b16 %v351
    %v437 = vunpack.c.h.b16 %v351
    %v438 = vunpack.c.l.b16 %v352
    %v439 = vunpack.c.h.b16 %v352
    %v440 = vunpack.c.l.b16 %v353
    %v441 = vunpack.c.h.b16 %v353
    %v442 = vunpack.c.l.b16 %v354
    %v443 = vunpack.c.h.b16 %v354
    %v444 = vunpack.c.l.b16 %v355
    %v445 = vunpack.c.h.b16 %v355
    %v446 = vunpack.c.l.b16 %v356
    %v447 = vunpack.c.h.b16 %v356
    %v448 = vunpack.c.l.b16 %v357
    %v449 = vunpack.c.h.b16 %v357
    %v450 = vunpack.c.l.b16 %v358
    %v451 = vunpack.c.h.b16 %v358
    %v452 = vunpack.c.l.b16 %v359
    %v453 = vunpack.c.h.b16 %v359
    %v454 = vunpack.c.l.b16 %v360
    %v455 = vunpack.c.h.b16 %v360
    %v456 = vunpack.c.l.b16 %v361
    %v457 = vunpack.c.h.b16 %v361
    %v458 = vunpack.c.l.b16 %v362
    %v459 = vunpack.c.h.b16 %v362
    %v460 = vunpack.c.l.b16 %v363
    %v461 = vunpack.c.h.b16 %v363
    %v462 = vunpack.c.l.b16 %v364
    %v463 = vunpack.c.h.b16 %v364
    %v464 = vunpack.c.l.b16 %v365
    %v465 = vunpack.c.h.b16 %v365
    %v466 = vunpack.c.l.b16 %v366
    %v467 = vunpack.c.h.b16 %v366
    %v468 = vunpack.c.l.b16 %v367
    %v469 = vunpack.c.h.b16 %v367
    %v470 = vunpack.c.l.b16 %v368
    %v471 = vunpack.c.h.b16 %v368
    %v472 = vunpack.c.l.b16 %v369
    %v473 = vunpack.c.h.b16 %v369
    %v474 = vunpack.c.l.b16 %v370
    %v475 = vunpack.c.h.b16 %v370
    %v476 = vpack.c.b16 %v416, %v412
    %v477 = vpack.c.b16 %v417, %v413
    %v478 = vpack.c.b16 %v418, %v414
    %v479 = vpack.c.b16 %v419, %v415
    %v480 = vpack.c.b16 %v424, %v420
    %v481 = vpack.c.b16 %v425, %v421
    %v482 = vpack.c.b16 %v426, %v422
    %v483 = vpack.c.b16 %v427, %v423
    %v484 = vpack.c.b16 %v432, %v428
    %v485 = vpack.c.b16 %v433, %v429
    %v486 = vpack.c.b16 %v434, %v430
    %v487 = vpack.c.b16 %v435, %v431
    %v488 = vpack.c.b16 %v440, %v436
    %v489 = vpack.c.b16 %v441, %v437
    %v490 = vpack.c.b16 %v442, %v438
    %v491 = vpack.c.b16 %v443, %v439
    %v492 = vpack.c.b16 %v448, %v444
    %v493 = vpack.c.b16 %v449, %v445
    %v494 = vpack.c.b16 %v450, %v446
    %v495 = vpack.c.b16 %v451, %v447
    %v496 = vpack.c.b16 %v456, %v452
    %v497 = vpack.c.b16 %v457, %v453
    %v498 = vpack.c.b16 %v458, %v454
    %v499 = vpack.c.b16 %v459, %v455
    %v500 = vpack.c.b16 %v464, %v460
    %v501 = vpack.c.b16 %v465, %v461
    %v502 = vpack.c.b16 %v466, %v462
    %v503 = vpack.c.b16 %v467, %v463
    %v504 = vpack.c.b16 %v472, %v468
    %v505 = vpack.c.b16 %v473, %v469
    %v506 = vpack.c.b16 %v474, %v470
    %v507 = vpack.c.b16 %v475, %v471
    %540 = vmatprep.subr.bf16.mxu0 %v505
    %541 = vmatpush1.bf16.msra.mxu0 %v504
    %542 = vmatprep.subr.bf16.mxu0 %v501
    %543 = vmatpush1.bf16.msra.mxu0 %v500
    %544 = vmatprep.subr.bf16.mxu0 %v497
    %545 = vmatpush1.bf16.msra.mxu0 %v496
    %546 = vmatprep.subr.bf16.mxu0 %v493
    %547 = vmatpush1.bf16.msra.mxu0 %v492
    %548 = vmatprep.subr.bf16.mxu0 %v489
    %549 = vmatpush1.bf16.msra.mxu0 %v488
    %550 = vmatprep.subr.bf16.mxu0 %v485
    %551 = vmatpush1.bf16.msra.mxu0 %v484
    %552 = vmatprep.subr.bf16.mxu0 %v481
    %553 = vmatpush1.bf16.msra.mxu0 %v480
    %554 = vmatprep.subr.bf16.mxu0 %v477
    %555 = vmatpush1.bf16.msra.mxu0 %v476
    %556 = vmatprep.subr.bf16.mxu0 0
    %557 = vmatpush2.bf16.msra.mxu0 0
    %558 = vmatprep.subr.bf16.mxu0 0
    %559 = vmatpush2.bf16.msra.mxu0 0
    %560 = vmatprep.subr.bf16.mxu0 0
    %561 = vmatpush2.bf16.msra.mxu0 0
    %562 = vmatprep.subr.bf16.mxu0 0
    %563 = vmatpush2.bf16.msra.mxu0 0
    %564 = vmatprep.subr.bf16.mxu0 0
    %565 = vmatpush2.bf16.msra.mxu0 0
    %566 = vmatprep.subr.bf16.mxu0 0
    %567 = vmatpush2.bf16.msra.mxu0 0
    %568 = vmatprep.subr.bf16.mxu0 0
    %569 = vmatpush2.bf16.msra.mxu0 0
    %570 = vmatprep.subr.bf16.mxu0 0
    %571 = vmatpush2.bf16.msra.mxu0 0
    %572 = vmatprep.mubr.bf16.mxu0 0
    %573 = vmatmul.mubr.bf16.gmra.mxu0 0
    %v574 = vpop.f32.mrf.mxu0
    %v575 = vadd.f32 0.0, %v574
    %v576 = vpop.f32.mrf.mxu0
    %v577 = vadd.f32 0.0, %v576
    %v578 = vpop.f32.mrf.mxu0
    %v579 = vpop.f32.mrf.mxu0
    %580 = vdwg.mxu0
    %581 = vmatprep.subr.bf16.mxu0 %v507
    %582 = vmatpush1.bf16.msra.mxu0 %v506
    %583 = vmatprep.subr.bf16.mxu0 %v503
    %584 = vmatpush1.bf16.msra.mxu0 %v502
    %585 = vmatprep.subr.bf16.mxu0 %v499
    %586 = vmatpush1.bf16.msra.mxu0 %v498
    %587 = vmatprep.subr.bf16.mxu0 %v495
    %588 = vmatpush1.bf16.msra.mxu0 %v494
    %589 = vmatprep.subr.bf16.mxu0 %v491
    %590 = vmatpush1.bf16.msra.mxu0 %v490
    %591 = vmatprep.subr.bf16.mxu0 %v487
    %592 = vmatpush1.bf16.msra.mxu0 %v486
    %593 = vmatprep.subr.bf16.mxu0 %v483
    %594 = vmatpush1.bf16.msra.mxu0 %v482
    %595 = vmatprep.subr.bf16.mxu0 %v479
    %596 = vmatpush1.bf16.msra.mxu0 %v478
    %597 = vmatprep.subr.bf16.mxu0 0
    %598 = vmatpush2.bf16.msra.mxu0 0
    %599 = vmatprep.subr.bf16.mxu0 0
    %600 = vmatpush2.bf16.msra.mxu0 0
    %601 = vmatprep.subr.bf16.mxu0 0
    %602 = vmatpush2.bf16.msra.mxu0 0
    %603 = vmatprep.subr.bf16.mxu0 0
    %604 = vmatpush2.bf16.msra.mxu0 0
    %605 = vmatprep.subr.bf16.mxu0 0
    %606 = vmatpush2.bf16.msra.mxu0 0
    %607 = vmatprep.subr.bf16.mxu0 0
    %608 = vmatpush2.bf16.msra.mxu0 0
    %609 = vmatprep.subr.bf16.mxu0 0
    %610 = vmatpush2.bf16.msra.mxu0 0
    %611 = vmatprep.subr.bf16.mxu0 0
    %612 = vmatpush2.bf16.msra.mxu0 0
    %613 = vmatprep.mubr.bf16.mxu0 0
    %614 = vmatmul.mubr.bf16.gmra.mxu0 0
    %v615 = vpop.f32.mrf.mxu0
    %v616 = vadd.f32 0.0, %v615
    %v617 = vpop.f32.mrf.mxu0
    %v618 = vadd.f32 0.0, %v617
    %v619 = vpop.f32.mrf.mxu0
    %v620 = vpop.f32.mrf.mxu0
    %621 = vdwg.mxu0
    %v622 = vadd.f32 %v376, %v575
    %v623 = vadd.f32 %v377, %v577
    %v624 = vadd.f32 %v378, %v616
    %v625 = vadd.f32 %v379, %v618
    %v626 = vxor.u32 %v622, 2147483648
    %v627 = vxor.u32 %v623, 2147483648
    %v628 = vxor.u32 %v624, 2147483648
    %v629 = vmul.f32 %v626, 1.442695
    %v630 = vpow.pop %v629
    %v631 = vmul.f32 %v627, 1.442695
    %v632 = vpow.pop %v631
    %v633 = vmul.f32 %v628, 1.442695
    %v634 = vpow.pop %v633
    %v635 = vadd.f32 %v630, 1.0
    %v636 = vadd.f32 %v632, 1.0
    %v637 = vadd.f32 %v634, 1.0
    %v638 = vrcp.pop %v635
    %v639 = vmul.f32 1.0, %v638
    %v640 = vrcp.pop %v636
    %v641 = vmul.f32 1.0, %v640
    %v642 = vrcp.pop %v637
    %v643 = vmul.f32 1.0, %v642
    %v644 = vtanh.pop %v625
    %v645 = vmul.f32 %v641, 0.0
    %v646 = vmul.f32 %v639, %v644
    %v647 = vadd.f32 %v645, %v646
    %v648 = vtanh.pop %v647
    %v649 = vmul.f32 %v643, %v648
    %vm650 = vcmp.gt.s32.totalorder %v372, 0
    %v651 = vsel %vm650, 1, 0
    %v652 = vcvt.s32.f32 %v651
    %654 = vset.pattern.permute.xlu0 0
    %655 = vperm.xlu0 %654, %v652
    %v656 = vpop.permute.xlu0 %655
    %v658 = vmul.f32 %v649, %v656
    %v660 = vlaneseq
    %v661 = vshrl.u32 %v660, 7
    %v662 = vsub.s32 0, %v661
    %v663 = vrot.slane %v371, %v662
    %v665 = vmul.f32 %v658, %v663
    %666 = vadd.xlane.f32.xlu0 %v665
    %v667 = vpop.xlane.xlu0 %666
    %v668 = vsub.f32 1.0, %v652
    %v669 = vmul.f32 %v668, 1e+08
    %v670 = vsub.f32 %v667, %v669
    %v671 = vmax.f32 %v670, -1e+30
    %v672 = vsub.f32 -1e+30, %v671
    %v673 = vmul.f32 %v672, 1.442695
    %v674 = vpow.pop %v673
    %v675 = vsub.f32 %v670, %v671
    %v676 = vmul.f32 %v675, 1.442695
    %v677 = vpow.pop %v676
    %v678 = vmul.f32 %v674, 0.0
    %v679 = vadd.f32 %v678, %v677
    %681 = vset.pattern.permute.xlu0 0
    %682 = vperm.xlu0 %681, %v674
    %v683 = vpop.permute.xlu0 %682
    %v685 = vmul.f32 %v683, 0.0
    %687 = vset.pattern.permute.xlu0 0
    %688 = vperm.xlu0 %687, %v677
    %v689 = vpop.permute.xlu0 %688
    %v691 = vmul.f32 %v689, %v658
    %v692 = vadd.f32 %v685, %v691
    %s693 = smul.u32 1, 4
    %s694 = smul.addr %s693, 8
    %s695 = scalar_lea.vmem [#allocation2], %s694
    %v696 = vld [vmem:[%s695] sm:$0xff]
    %v697 = vld [vmem:[%s695 + $0x8] sm:$0xff]
    %v698 = vld [vmem:[%s695 + $0x10] sm:$0xff]
    %v699 = vld [vmem:[%s695 + $0x18] sm:$0xff]
    %v700 = vpack.c.bf16 %v649, %v649
    %701 = vmatprep.subr.bf16.mxu0 %v505
    %702 = vmatpush1.bf16.msra.mxu0 %v504
    %703 = vmatprep.subr.bf16.mxu0 %v501
    %704 = vmatpush1.bf16.msra.mxu0 %v500
    %705 = vmatprep.subr.bf16.mxu0 %v497
    %706 = vmatpush1.bf16.msra.mxu0 %v496
    %707 = vmatprep.subr.bf16.mxu0 %v493
    %708 = vmatpush1.bf16.msra.mxu0 %v492
    %709 = vmatprep.subr.bf16.mxu0 %v489
    %710 = vmatpush1.bf16.msra.mxu0 %v488
    %711 = vmatprep.subr.bf16.mxu0 %v485
    %712 = vmatpush1.bf16.msra.mxu0 %v484
    %713 = vmatprep.subr.bf16.mxu0 %v481
    %714 = vmatpush1.bf16.msra.mxu0 %v480
    %715 = vmatprep.subr.bf16.mxu0 %v477
    %716 = vmatpush1.bf16.msra.mxu0 %v476
    %717 = vmatprep.subr.bf16.mxu0 0
    %718 = vmatpush2.bf16.msra.mxu0 0
    %719 = vmatprep.subr.bf16.mxu0 0
    %720 = vmatpush2.bf16.msra.mxu0 0
    %721 = vmatprep.subr.bf16.mxu0 0
    %722 = vmatpush2.bf16.msra.mxu0 0
    %723 = vmatprep.subr.bf16.mxu0 0
    %724 = vmatpush2.bf16.msra.mxu0 0
    %725 = vmatprep.subr.bf16.mxu0 0
    %726 = vmatpush2.bf16.msra.mxu0 0
    %727 = vmatprep.subr.bf16.mxu0 0
    %728 = vmatpush2.bf16.msra.mxu0 0
    %729 = vmatprep.subr.bf16.mxu0 0
    %730 = vmatpush2.bf16.msra.mxu0 0
    %731 = vmatprep.subr.bf16.mxu0 0
    %732 = vmatpush2.bf16.msra.mxu0 0
    %733 = vmatprep.mubr.bf16.mxu0 0
    %734 = vmatmul.mubr.bf16.gmra.mxu0 %v700
    %v735 = vpop.f32.mrf.mxu0
    %v736 = vadd.f32 0.0, %v735
    %v737 = vpop.f32.mrf.mxu0
    %v738 = vadd.f32 0.0, %v737
    %v739 = vpop.f32.mrf.mxu0
    %v740 = vpop.f32.mrf.mxu0
    %741 = vdwg.mxu0
    %742 = vmatprep.subr.bf16.mxu0 %v507
    %743 = vmatpush1.bf16.msra.mxu0 %v506
    %744 = vmatprep.subr.bf16.mxu0 %v503
    %745 = vmatpush1.bf16.msra.mxu0 %v502
    %746 = vmatprep.subr.bf16.mxu0 %v499
    %747 = vmatpush1.bf16.msra.mxu0 %v498
    %748 = vmatprep.subr.bf16.mxu0 %v495
    %749 = vmatpush1.bf16.msra.mxu0 %v494
    %750 = vmatprep.subr.bf16.mxu0 %v491
    %751 = vmatpush1.bf16.msra.mxu0 %v490
    %752 = vmatprep.subr.bf16.mxu0 %v487
    %753 = vmatpush1.bf16.msra.mxu0 %v486
    %754 = vmatprep.subr.bf16.mxu0 %v483
    %755 = vmatpush1.bf16.msra.mxu0 %v482
    %756 = vmatprep.subr.bf16.mxu0 %v479
    %757 = vmatpush1.bf16.msra.mxu0 %v478
    %758 = vmatprep.subr.bf16.mxu0 0
    %759 = vmatpush2.bf16.msra.mxu0 0
    %760 = vmatprep.subr.bf16.mxu0 0
    %761 = vmatpush2.bf16.msra.mxu0 0
    %762 = vmatprep.subr.bf16.mxu0 0
    %763 = vmatpush2.bf16.msra.mxu0 0
    %764 = vmatprep.subr.bf16.mxu0 0
    %765 = vmatpush2.bf16.msra.mxu0 0
    %766 = vmatprep.subr.bf16.mxu0 0
    %767 = vmatpush2.bf16.msra.mxu0 0
    %768 = vmatprep.subr.bf16.mxu0 0
    %769 = vmatpush2.bf16.msra.mxu0 0
    %770 = vmatprep.subr.bf16.mxu0 0
    %771 = vmatpush2.bf16.msra.mxu0 0
    %772 = vmatprep.subr.bf16.mxu0 0
    %773 = vmatpush2.bf16.msra.mxu0 0
    %774 = vmatprep.mubr.bf16.mxu0 0
    %775 = vmatmul.mubr.bf16.gmra.mxu0 %v700
    %v776 = vpop.f32.mrf.mxu0
    %v777 = vadd.f32 0.0, %v776
    %v778 = vpop.f32.mrf.mxu0
    %v779 = vadd.f32 0.0, %v778
    %v780 = vpop.f32.mrf.mxu0
    %v781 = vpop.f32.mrf.mxu0
    %782 = vdwg.mxu0
    %v783 = vadd.f32 %v696, %v736
    %v784 = vadd.f32 %v697, %v738
    %v785 = vadd.f32 %v698, %v777
    %v786 = vadd.f32 %v699, %v779
    %v787 = vxor.u32 %v783, 2147483648
    %v788 = vxor.u32 %v784, 2147483648
    %v789 = vxor.u32 %v785, 2147483648
    %v790 = vmul.f32 %v787, 1.442695
    %v791 = vpow.pop %v790
    %v792 = vmul.f32 %v788, 1.442695
    %v793 = vpow.pop %v792
    %v794 = vmul.f32 %v789, 1.442695
    %v795 = vpow.pop %v794
    %v796 = vadd.f32 %v791, 1.0
    %v797 = vadd.f32 %v793, 1.0
    %v798 = vadd.f32 %v795, 1.0
    %v799 = vrcp.pop %v796
    %v800 = vmul.f32 1.0, %v799
    %v801 = vrcp.pop %v797
    %v802 = vmul.f32 1.0, %v801
    %v803 = vrcp.pop %v798
    %v804 = vmul.f32 1.0, %v803
    %v805 = vtanh.pop %v786
    %v806 = vmul.f32 %v802, %v647
    %v807 = vmul.f32 %v800, %v805
    %v808 = vadd.f32 %v806, %v807
    %v809 = vtanh.pop %v808
    %v810 = vmul.f32 %v804, %v809
    %vm811 = vcmp.gt.s32.totalorder %v372, 1
    %v812 = vsel %vm811, 1, 0
    %v813 = vcvt.s32.f32 %v812
    %815 = vset.pattern.permute.xlu0 0
    %816 = vperm.xlu0 %815, %v813
    %v817 = vpop.permute.xlu0 %816
    %v819 = vmul.f32 %v810, %v817
    %v820 = vmul.f32 %v819, %v663
    %821 = vadd.xlane.f32.xlu0 %v820
    %v822 = vpop.xlane.xlu0 %821
    %v823 = vsub.f32 1.0, %v813
    %v824 = vmul.f32 %v823, 1e+08
    %v825 = vsub.f32 %v822, %v824
    %v826 = vmax.f32 %v671, %v825
    %v827 = vsub.f32 %v671, %v826
    %v828 = vmul.f32 %v827, 1.442695
    %v829 = vpow.pop %v828
    %v830 = vsub.f32 %v825, %v826
    %v831 = vmul.f32 %v830, 1.442695
    %v832 = vpow.pop %v831
    %v833 = vmul.f32 %v829, %v679
    %v834 = vadd.f32 %v833, %v832
    %836 = vset.pattern.permute.xlu0 0
    %837 = vperm.xlu0 %836, %v829
    %v838 = vpop.permute.xlu0 %837
    %v840 = vmul.f32 %v838, %v692
    %842 = vset.pattern.permute.xlu0 0
    %843 = vperm.xlu0 %842, %v832
    %v844 = vpop.permute.xlu0 %843
    %v846 = vmul.f32 %v844, %v819
    %v847 = vadd.f32 %v840, %v846
    %s848 = smul.u32 2, 4
    %s849 = smul.addr %s848, 8
    %s850 = scalar_lea.vmem [#allocation2], %s849
    %v851 = vld [vmem:[%s850] sm:$0xff]
    %v852 = vld [vmem:[%s850 + $0x8] sm:$0xff]
    %v853 = vld [vmem:[%s850 + $0x10] sm:$0xff]
    %v854 = vld [vmem:[%s850 + $0x18] sm:$0xff]
    %v855 = vpack.c.bf16 %v810, %v810
    %856 = vmatprep.subr.bf16.mxu0 %v505
    %857 = vmatpush1.bf16.msra.mxu0 %v504
    %858 = vmatprep.subr.bf16.mxu0 %v501
    %859 = vmatpush1.bf16.msra.mxu0 %v500
    %860 = vmatprep.subr.bf16.mxu0 %v497
    %861 = vmatpush1.bf16.msra.mxu0 %v496
    %862 = vmatprep.subr.bf16.mxu0 %v493
    %863 = vmatpush1.bf16.msra.mxu0 %v492
    %864 = vmatprep.subr.bf16.mxu0 %v489
    %865 = vmatpush1.bf16.msra.mxu0 %v488
    %866 = vmatprep.subr.bf16.mxu0 %v485
    %867 = vmatpush1.bf16.msra.mxu0 %v484
    %868 = vmatprep.subr.bf16.mxu0 %v481
    %869 = vmatpush1.bf16.msra.mxu0 %v480
    %870 = vmatprep.subr.bf16.mxu0 %v477
    %871 = vmatpush1.bf16.msra.mxu0 %v476
    %872 = vmatprep.subr.bf16.mxu0 0
    %873 = vmatpush2.bf16.msra.mxu0 0
    %874 = vmatprep.subr.bf16.mxu0 0
    %875 = vmatpush2.bf16.msra.mxu0 0
    %876 = vmatprep.subr.bf16.mxu0 0
    %877 = vmatpush2.bf16.msra.mxu0 0
    %878 = vmatprep.subr.bf16.mxu0 0
    %879 = vmatpush2.bf16.msra.mxu0 0
    %880 = vmatprep.subr.bf16.mxu0 0
    %881 = vmatpush2.bf16.msra.mxu0 0
    %882 = vmatprep.subr.bf16.mxu0 0
    %883 = vmatpush2.bf16.msra.mxu0 0
    %884 = vmatprep.subr.bf16.mxu0 0
    %885 = vmatpush2.bf16.msra.mxu0 0
    %886 = vmatprep.subr.bf16.mxu0 0
    %887 = vmatpush2.bf16.msra.mxu0 0
    %888 = vmatprep.mubr.bf16.mxu0 0
    %889 = vmatmul.mubr.bf16.gmra.mxu0 %v855
    %v890 = vpop.f32.mrf.mxu0
    %v891 = vadd.f32 0.0, %v890
    %v892 = vpop.f32.mrf.mxu0
    %v893 = vadd.f32 0.0, %v892
    %v894 = vpop.f32.mrf.mxu0
    %v895 = vpop.f32.mrf.mxu0
    %896 = vdwg.mxu0
    %897 = vmatprep.subr.bf16.mxu0 %v507
    %898 = vmatpush1.bf16.msra.mxu0 %v506
    %899 = vmatprep.subr.bf16.mxu0 %v503
    %900 = vmatpush1.bf16.msra.mxu0 %v502
    %901 = vmatprep.subr.bf16.mxu0 %v499
    %902 = vmatpush1.bf16.msra.mxu0 %v498
    %903 = vmatprep.subr.bf16.mxu0 %v495
    %904 = vmatpush1.bf16.msra.mxu0 %v494
    %905 = vmatprep.subr.bf16.mxu0 %v491
    %906 = vmatpush1.bf16.msra.mxu0 %v490
    %907 = vmatprep.subr.bf16.mxu0 %v487
    %908 = vmatpush1.bf16.msra.mxu0 %v486
    %909 = vmatprep.subr.bf16.mxu0 %v483
    %910 = vmatpush1.bf16.msra.mxu0 %v482
    %911 = vmatprep.subr.bf16.mxu0 %v479
    %912 = vmatpush1.bf16.msra.mxu0 %v478
    %913 = vmatprep.subr.bf16.mxu0 0
    %914 = vmatpush2.bf16.msra.mxu0 0
    %915 = vmatprep.subr.bf16.mxu0 0
    %916 = vmatpush2.bf16.msra.mxu0 0
    %917 = vmatprep.subr.bf16.mxu0 0
    %918 = vmatpush2.bf16.msra.mxu0 0
    %919 = vmatprep.subr.bf16.mxu0 0
    %920 = vmatpush2.bf16.msra.mxu0 0
    %921 = vmatprep.subr.bf16.mxu0 0
    %922 = vmatpush2.bf16.msra.mxu0 0
    %923 = vmatprep.subr.bf16.mxu0 0
    %924 = vmatpush2.bf16.msra.mxu0 0
    %925 = vmatprep.subr.bf16.mxu0 0
    %926 = vmatpush2.bf16.msra.mxu0 0
    %927 = vmatprep.subr.bf16.mxu0 0
    %928 = vmatpush2.bf16.msra.mxu0 0
    %929 = vmatprep.mubr.bf16.mxu0 0
    %930 = vmatmul.mubr.bf16.gmra.mxu0 %v855
    %v931 = vpop.f32.mrf.mxu0
    %v932 = vadd.f32 0.0, %v931
    %v933 = vpop.f32.mrf.mxu0
    %v934 = vadd.f32 0.0, %v933
    %v935 = vpop.f32.mrf.mxu0
    %v936 = vpop.f32.mrf.mxu0
    %937 = vdwg.mxu0
    %v938 = vadd.f32 %v851, %v891
    %v939 = vadd.f32 %v852, %v893
    %v940 = vadd.f32 %v853, %v932
    %v941 = vadd.f32 %v854, %v934
    %v942 = vxor.u32 %v938, 2147483648
    %v943 = vxor.u32 %v939, 2147483648
    %v944 = vxor.u32 %v940, 2147483648
    %v945 = vmul.f32 %v942, 1.442695
    %v946 = vpow.pop %v945
    %v947 = vmul.f32 %v943, 1.442695
    %v948 = vpow.pop %v947
    %v949 = vmul.f32 %v944, 1.442695
    %v950 = vpow.pop %v949
    %v951 = vadd.f32 %v946, 1.0
    %v952 = vadd.f32 %v948, 1.0
    %v953 = vadd.f32 %v950, 1.0
    %v954 = vrcp.pop %v951
    %v955 = vmul.f32 1.0, %v954
    %v956 = vrcp.pop %v952
    %v957 = vmul.f32 1.0, %v956
    %v958 = vrcp.pop %v953
    %v959 = vmul.f32 1.0, %v958
    %v960 = vtanh.pop %v941
    %v961 = vmul.f32 %v957, %v808
    %v962 = vmul.f32 %v955, %v960
    %v963 = vadd.f32 %v961, %v962
    %v964 = vtanh.pop %v963
    %v965 = vmul.f32 %v959, %v964
    %vm966 = vcmp.gt.s32.totalorder %v372, 2
    %v967 = vsel %vm966, 1, 0
    %v968 = vcvt.s32.f32 %v967
    %970 = vset.pattern.permute.xlu0 0
    %971 = vperm.xlu0 %970, %v968
    %v972 = vpop.permute.xlu0 %971
    %v974 = vmul.f32 %v965, %v972
    %v975 = vmul.f32 %v974, %v663
    %976 = vadd.xlane.f32.xlu0 %v975
    %v977 = vpop.xlane.xlu0 %976
    %v978 = vsub.f32 1.0, %v968
    %v979 = vmul.f32 %v978, 1e+08
    %v980 = vsub.f32 %v977, %v979
    %v981 = vmax.f32 %v826, %v980
    %v982 = vsub.f32 %v826, %v981
    %v983 = vmul.f32 %v982, 1.442695
    %v984 = vpow.pop %v983
    %v985 = vsub.f32 %v980, %v981
    %v986 = vmul.f32 %v985, 1.442695
    %v987 = vpow.pop %v986
    %v988 = vmul.f32 %v984, %v834
    %v989 = vadd.f32 %v988, %v987
    %991 = vset.pattern.permute.xlu0 0
    %992 = vperm.xlu0 %991, %v984
    %v993 = vpop.permute.xlu0 %992
    %v995 = vmul.f32 %v993, %v847
    %997 = vset.pattern.permute.xlu0 0
    %998 = vperm.xlu0 %997, %v987
    %v999 = vpop.permute.xlu0 %998
    %v1001 = vmul.f32 %v999, %v974
    %v1002 = vadd.f32 %v995, %v1001
    %s1003 = smul.u32 3, 4
    %s1004 = smul.addr %s1003, 8
    %s1005 = scalar_lea.vmem [#allocation2], %s1004
    %v1006 = vld [vmem:[%s1005] sm:$0xff]
    %v1007 = vld [vmem:[%s1005 + $0x8] sm:$0xff]
    %v1008 = vld [vmem:[%s1005 + $0x10] sm:$0xff]
    %v1009 = vld [vmem:[%s1005 + $0x18] sm:$0xff]
    %v1010 = vpack.c.bf16 %v965, %v965
    %1011 = vmatprep.subr.bf16.mxu0 %v505
    %1012 = vmatpush1.bf16.msra.mxu0 %v504
    %1013 = vmatprep.subr.bf16.mxu0 %v501
    %1014 = vmatpush1.bf16.msra.mxu0 %v500
    %1015 = vmatprep.subr.bf16.mxu0 %v497
    %1016 = vmatpush1.bf16.msra.mxu0 %v496
    %1017 = vmatprep.subr.bf16.mxu0 %v493
    %1018 = vmatpush1.bf16.msra.mxu0 %v492
    %1019 = vmatprep.subr.bf16.mxu0 %v489
    %1020 = vmatpush1.bf16.msra.mxu0 %v488
    %1021 = vmatprep.subr.bf16.mxu0 %v485
    %1022 = vmatpush1.bf16.msra.mxu0 %v484
    %1023 = vmatprep.subr.bf16.mxu0 %v481
    %1024 = vmatpush1.bf16.msra.mxu0 %v480
    %1025 = vmatprep.subr.bf16.mxu0 %v477
    %1026 = vmatpush1.bf16.msra.mxu0 %v476
    %1027 = vmatprep.subr.bf16.mxu0 0
    %1028 = vmatpush2.bf16.msra.mxu0 0
    %1029 = vmatprep.subr.bf16.mxu0 0
    %1030 = vmatpush2.bf16.msra.mxu0 0
    %1031 = vmatprep.subr.bf16.mxu0 0
    %1032 = vmatpush2.bf16.msra.mxu0 0
    %1033 = vmatprep.subr.bf16.mxu0 0
    %1034 = vmatpush2.bf16.msra.mxu0 0
    %1035 = vmatprep.subr.bf16.mxu0 0
    %1036 = vmatpush2.bf16.msra.mxu0 0
    %1037 = vmatprep.subr.bf16.mxu0 0
    %1038 = vmatpush2.bf16.msra.mxu0 0
    %1039 = vmatprep.subr.bf16.mxu0 0
    %1040 = vmatpush2.bf16.msra.mxu0 0
    %1041 = vmatprep.subr.bf16.mxu0 0
    %1042 = vmatpush2.bf16.msra.mxu0 0
    %1043 = vmatprep.mubr.bf16.mxu0 0
    %1044 = vmatmul.mubr.bf16.gmra.mxu0 %v1010
    %v1045 = vpop.f32.mrf.mxu0
    %v1046 = vadd.f32 0.0, %v1045
    %v1047 = vpop.f32.mrf.mxu0
    %v1048 = vadd.f32 0.0, %v1047
    %v1049 = vpop.f32.mrf.mxu0
    %v1050 = vpop.f32.mrf.mxu0
    %1051 = vdwg.mxu0
    %1052 = vmatprep.subr.bf16.mxu0 %v507
    %1053 = vmatpush1.bf16.msra.mxu0 %v506
    %1054 = vmatprep.subr.bf16.mxu0 %v503
    %1055 = vmatpush1.bf16.msra.mxu0 %v502
    %1056 = vmatprep.subr.bf16.mxu0 %v499
    %1057 = vmatpush1.bf16.msra.mxu0 %v498
    %1058 = vmatprep.subr.bf16.mxu0 %v495
    %1059 = vmatpush1.bf16.msra.mxu0 %v494
    %1060 = vmatprep.subr.bf16.mxu0 %v491
    %1061 = vmatpush1.bf16.msra.mxu0 %v490
    %1062 = vmatprep.subr.bf16.mxu0 %v487
    %1063 = vmatpush1.bf16.msra.mxu0 %v486
    %1064 = vmatprep.subr.bf16.mxu0 %v483
    %1065 = vmatpush1.bf16.msra.mxu0 %v482
    %1066 = vmatprep.subr.bf16.mxu0 %v479
    %1067 = vmatpush1.bf16.msra.mxu0 %v478
    %1068 = vmatprep.subr.bf16.mxu0 0
    %1069 = vmatpush2.bf16.msra.mxu0 0
    %1070 = vmatprep.subr.bf16.mxu0 0
    %1071 = vmatpush2.bf16.msra.mxu0 0
    %1072 = vmatprep.subr.bf16.mxu0 0
    %1073 = vmatpush2.bf16.msra.mxu0 0
    %1074 = vmatprep.subr.bf16.mxu0 0
    %1075 = vmatpush2.bf16.msra.mxu0 0
    %1076 = vmatprep.subr.bf16.mxu0 0
    %1077 = vmatpush2.bf16.msra.mxu0 0
    %1078 = vmatprep.subr.bf16.mxu0 0
    %1079 = vmatpush2.bf16.msra.mxu0 0
    %1080 = vmatprep.subr.bf16.mxu0 0
    %1081 = vmatpush2.bf16.msra.mxu0 0
    %1082 = vmatprep.subr.bf16.mxu0 0
    %1083 = vmatpush2.bf16.msra.mxu0 0
    %1084 = vmatprep.mubr.bf16.mxu0 0
    %1085 = vmatmul.mubr.bf16.gmra.mxu0 %v1010
    %v1086 = vpop.f32.mrf.mxu0
    %v1087 = vadd.f32 0.0, %v1086
    %v1088 = vpop.f32.mrf.mxu0
    %v1089 = vadd.f32 0.0, %v1088
    %v1090 = vpop.f32.mrf.mxu0
    %v1091 = vpop.f32.mrf.mxu0
    %1092 = vdwg.mxu0
    %v1093 = vadd.f32 %v1006, %v1046
    %v1094 = vadd.f32 %v1007, %v1048
    %v1095 = vadd.f32 %v1008, %v1087
    %v1096 = vadd.f32 %v1009, %v1089
    %v1097 = vxor.u32 %v1093, 2147483648
    %v1098 = vxor.u32 %v1094, 2147483648
    %v1099 = vxor.u32 %v1095, 2147483648
    %v1100 = vmul.f32 %v1097, 1.442695
    %v1101 = vpow.pop %v1100
    %v1102 = vmul.f32 %v1098, 1.442695
    %v1103 = vpow.pop %v1102
    %v1104 = vmul.f32 %v1099, 1.442695
    %v1105 = vpow.pop %v1104
    %v1106 = vadd.f32 %v1101, 1.0
    %v1107 = vadd.f32 %v1103, 1.0
    %v1108 = vadd.f32 %v1105, 1.0
    %v1109 = vrcp.pop %v1106
    %v1110 = vmul.f32 1.0, %v1109
    %v1111 = vrcp.pop %v1107
    %v1112 = vmul.f32 1.0, %v1111
    %v1113 = vrcp.pop %v1108
    %v1114 = vmul.f32 1.0, %v1113
    %v1115 = vtanh.pop %v1096
    %v1116 = vmul.f32 %v1112, %v963
    %v1117 = vmul.f32 %v1110, %v1115
    %v1118 = vadd.f32 %v1116, %v1117
    %v1119 = vtanh.pop %v1118
    %v1120 = vmul.f32 %v1114, %v1119
    %vm1121 = vcmp.gt.s32.totalorder %v372, 3
    %v1122 = vsel %vm1121, 1, 0
    %v1123 = vcvt.s32.f32 %v1122
    %1125 = vset.pattern.permute.xlu0 0
    %1126 = vperm.xlu0 %1125, %v1123
    %v1127 = vpop.permute.xlu0 %1126
    %v1129 = vmul.f32 %v1120, %v1127
    %v1130 = vmul.f32 %v1129, %v663
    %1131 = vadd.xlane.f32.xlu0 %v1130
    %v1132 = vpop.xlane.xlu0 %1131
    %v1133 = vsub.f32 1.0, %v1123
    %v1134 = vmul.f32 %v1133, 1e+08
    %v1135 = vsub.f32 %v1132, %v1134
    %v1136 = vmax.f32 %v981, %v1135
    %v1137 = vsub.f32 %v981, %v1136
    %v1138 = vmul.f32 %v1137, 1.442695
    %v1139 = vpow.pop %v1138
    %v1140 = vsub.f32 %v1135, %v1136
    %v1141 = vmul.f32 %v1140, 1.442695
    %v1142 = vpow.pop %v1141
    %v1143 = vmul.f32 %v1139, %v989
    %v1144 = vadd.f32 %v1143, %v1142
    %1146 = vset.pattern.permute.xlu0 0
    %1147 = vperm.xlu0 %1146, %v1139
    %v1148 = vpop.permute.xlu0 %1147
    %v1150 = vmul.f32 %v1148, %v1002
    %1152 = vset.pattern.permute.xlu0 0
    %1153 = vperm.xlu0 %1152, %v1142
    %v1154 = vpop.permute.xlu0 %1153
    %v1156 = vmul.f32 %v1154, %v1129
    %v1157 = vadd.f32 %v1150, %v1156
    %s1158 = smul.u32 4, 4
    %s1159 = smul.addr %s1158, 8
    %s1160 = scalar_lea.vmem [#allocation2], %s1159
    %v1161 = vld [vmem:[%s1160] sm:$0xff]
    %v1162 = vld [vmem:[%s1160 + $0x8] sm:$0xff]
    %v1163 = vld [vmem:[%s1160 + $0x10] sm:$0xff]
    %v1164 = vld [vmem:[%s1160 + $0x18] sm:$0xff]
    %v1165 = vpack.c.bf16 %v1120, %v1120
    %1166 = vmatprep.subr.bf16.mxu0 %v505
    %1167 = vmatpush1.bf16.msra.mxu0 %v504
    %1168 = vmatprep.subr.bf16.mxu0 %v501
    %1169 = vmatpush1.bf16.msra.mxu0 %v500
    %1170 = vmatprep.subr.bf16.mxu0 %v497
    %1171 = vmatpush1.bf16.msra.mxu0 %v496
    %1172 = vmatprep.subr.bf16.mxu0 %v493
    %1173 = vmatpush1.bf16.msra.mxu0 %v492
    %1174 = vmatprep.subr.bf16.mxu0 %v489
    %1175 = vmatpush1.bf16.msra.mxu0 %v488
    %1176 = vmatprep.subr.bf16.mxu0 %v485
    %1177 = vmatpush1.bf16.msra.mxu0 %v484
    %1178 = vmatprep.subr.bf16.mxu0 %v481
    %1179 = vmatpush1.bf16.msra.mxu0 %v480
    %1180 = vmatprep.subr.bf16.mxu0 %v477
    %1181 = vmatpush1.bf16.msra.mxu0 %v476
    %1182 = vmatprep.subr.bf16.mxu0 0
    %1183 = vmatpush2.bf16.msra.mxu0 0
    %1184 = vmatprep.subr.bf16.mxu0 0
    %1185 = vmatpush2.bf16.msra.mxu0 0
    %1186 = vmatprep.subr.bf16.mxu0 0
    %1187 = vmatpush2.bf16.msra.mxu0 0
    %1188 = vmatprep.subr.bf16.mxu0 0
    %1189 = vmatpush2.bf16.msra.mxu0 0
    %1190 = vmatprep.subr.bf16.mxu0 0
    %1191 = vmatpush2.bf16.msra.mxu0 0
    %1192 = vmatprep.subr.bf16.mxu0 0
    %1193 = vmatpush2.bf16.msra.mxu0 0
    %1194 = vmatprep.subr.bf16.mxu0 0
    %1195 = vmatpush2.bf16.msra.mxu0 0
    %1196 = vmatprep.subr.bf16.mxu0 0
    %1197 = vmatpush2.bf16.msra.mxu0 0
    %1198 = vmatprep.mubr.bf16.mxu0 0
    %1199 = vmatmul.mubr.bf16.gmra.mxu0 %v1165
    %v1200 = vpop.f32.mrf.mxu0
    %v1201 = vadd.f32 0.0, %v1200
    %v1202 = vpop.f32.mrf.mxu0
    %v1203 = vadd.f32 0.0, %v1202
    %v1204 = vpop.f32.mrf.mxu0
    %v1205 = vpop.f32.mrf.mxu0
    %1206 = vdwg.mxu0
    %1207 = vmatprep.subr.bf16.mxu0 %v507
    %1208 = vmatpush1.bf16.msra.mxu0 %v506
    %1209 = vmatprep.subr.bf16.mxu0 %v503
    %1210 = vmatpush1.bf16.msra.mxu0 %v502
    %1211 = vmatprep.subr.bf16.mxu0 %v499
    %1212 = vmatpush1.bf16.msra.mxu0 %v498
    %1213 = vmatprep.subr.bf16.mxu0 %v495
    %1214 = vmatpush1.bf16.msra.mxu0 %v494
    %1215 = vmatprep.subr.bf16.mxu0 %v491
    %1216 = vmatpush1.bf16.msra.mxu0 %v490
    %1217 = vmatprep.subr.bf16.mxu0 %v487
    %1218 = vmatpush1.bf16.msra.mxu0 %v486
    %1219 = vmatprep.subr.bf16.mxu0 %v483
    %1220 = vmatpush1.bf16.msra.mxu0 %v482
    %1221 = vmatprep.subr.bf16.mxu0 %v479
    %1222 = vmatpush1.bf16.msra.mxu0 %v478
    %1223 = vmatprep.subr.bf16.mxu0 0
    %1224 = vmatpush2.bf16.msra.mxu0 0
    %1225 = vmatprep.subr.bf16.mxu0 0
    %1226 = vmatpush2.bf16.msra.mxu0 0
    %1227 = vmatprep.subr.bf16.mxu0 0
    %1228 = vmatpush2.bf16.msra.mxu0 0
    %1229 = vmatprep.subr.bf16.mxu0 0
    %1230 = vmatpush2.bf16.msra.mxu0 0
    %1231 = vmatprep.subr.bf16.mxu0 0
    %1232 = vmatpush2.bf16.msra.mxu0 0
    %1233 = vmatprep.subr.bf16.mxu0 0
    %1234 = vmatpush2.bf16.msra.mxu0 0
    %1235 = vmatprep.subr.bf16.mxu0 0
    %1236 = vmatpush2.bf16.msra.mxu0 0
    %1237 = vmatprep.subr.bf16.mxu0 0
    %1238 = vmatpush2.bf16.msra.mxu0 0
    %1239 = vmatprep.mubr.bf16.mxu0 0
    %1240 = vmatmul.mubr.bf16.gmra.mxu0 %v1165
    %v1241 = vpop.f32.mrf.mxu0
    %v1242 = vadd.f32 0.0, %v1241
    %v1243 = vpop.f32.mrf.mxu0
    %v1244 = vadd.f32 0.0, %v1243
    %v1245 = vpop.f32.mrf.mxu0
    %v1246 = vpop.f32.mrf.mxu0
    %1247 = vdwg.mxu0
    %v1248 = vadd.f32 %v1161, %v1201
    %v1249 = vadd.f32 %v1162, %v1203
    %v1250 = vadd.f32 %v1163, %v1242
    %v1251 = vadd.f32 %v1164, %v1244
    %v1252 = vxor.u32 %v1248, 2147483648
    %v1253 = vxor.u32 %v1249, 2147483648
    %v1254 = vxor.u32 %v1250, 2147483648
    %v1255 = vmul.f32 %v1252, 1.442695
    %v1256 = vpow.pop %v1255
    %v1257 = vmul.f32 %v1253, 1.442695
    %v1258 = vpow.pop %v1257
    %v1259 = vmul.f32 %v1254, 1.442695
    %v1260 = vpow.pop %v1259
    %v1261 = vadd.f32 %v1256, 1.0
    %v1262 = vadd.f32 %v1258, 1.0
    %v1263 = vadd.f32 %v1260, 1.0
    %v1264 = vrcp.pop %v1261
    %v1265 = vmul.f32 1.0, %v1264
    %v1266 = vrcp.pop %v1262
    %v1267 = vmul.f32 1.0, %v1266
    %v1268 = vrcp.pop %v1263
    %v1269 = vmul.f32 1.0, %v1268
    %v1270 = vtanh.pop %v1251
    %v1271 = vmul.f32 %v1267, %v1118
    %v1272 = vmul.f32 %v1265, %v1270
    %v1273 = vadd.f32 %v1271, %v1272
    %v1274 = vtanh.pop %v1273
    %v1275 = vmul.f32 %v1269, %v1274
    %vm1276 = vcmp.gt.s32.totalorder %v372, 4
    %v1277 = vsel %vm1276, 1, 0
    %v1278 = vcvt.s32.f32 %v1277
    %1280 = vset.pattern.permute.xlu0 0
    %1281 = vperm.xlu0 %1280, %v1278
    %v1282 = vpop.permute.xlu0 %1281
    %v1284 = vmul.f32 %v1275, %v1282
    %v1285 = vmul.f32 %v1284, %v663
    %1286 = vadd.xlane.f32.xlu0 %v1285
    %v1287 = vpop.xlane.xlu0 %1286
    %v1288 = vsub.f32 1.0, %v1278
    %v1289 = vmul.f32 %v1288, 1e+08
    %v1290 = vsub.f32 %v1287, %v1289
    %v1291 = vmax.f32 %v1136, %v1290
    %v1292 = vsub.f32 %v1136, %v1291
    %v1293 = vmul.f32 %v1292, 1.442695
    %v1294 = vpow.pop %v1293
    %v1295 = vsub.f32 %v1290, %v1291
    %v1296 = vmul.f32 %v1295, 1.442695
    %v1297 = vpow.pop %v1296
    %v1298 = vmul.f32 %v1294, %v1144
    %v1299 = vadd.f32 %v1298, %v1297
    %1301 = vset.pattern.permute.xlu0 0
    %1302 = vperm.xlu0 %1301, %v1294
    %v1303 = vpop.permute.xlu0 %1302
    %v1305 = vmul.f32 %v1303, %v1157
    %1307 = vset.pattern.permute.xlu0 0
    %1308 = vperm.xlu0 %1307, %v1297
    %v1309 = vpop.permute.xlu0 %1308
    %v1311 = vmul.f32 %v1309, %v1284
    %v1312 = vadd.f32 %v1305, %v1311
    %s1313 = smul.u32 5, 4
    %s1314 = smul.addr %s1313, 8
    %s1315 = scalar_lea.vmem [#allocation2], %s1314
    %v1316 = vld [vmem:[%s1315] sm:$0xff]
    %v1317 = vld [vmem:[%s1315 + $0x8] sm:$0xff]
    %v1318 = vld [vmem:[%s1315 + $0x10] sm:$0xff]
    %v1319 = vld [vmem:[%s1315 + $0x18] sm:$0xff]
    %v1320 = vpack.c.bf16 %v1275, %v1275
    %1321 = vmatprep.subr.bf16.mxu0 %v505
    %1322 = vmatpush1.bf16.msra.mxu0 %v504
    %1323 = vmatprep.subr.bf16.mxu0 %v501
    %1324 = vmatpush1.bf16.msra.mxu0 %v500
    %1325 = vmatprep.subr.bf16.mxu0 %v497
    %1326 = vmatpush1.bf16.msra.mxu0 %v496
    %1327 = vmatprep.subr.bf16.mxu0 %v493
    %1328 = vmatpush1.bf16.msra.mxu0 %v492
    %1329 = vmatprep.subr.bf16.mxu0 %v489
    %1330 = vmatpush1.bf16.msra.mxu0 %v488
    %1331 = vmatprep.subr.bf16.mxu0 %v485
    %1332 = vmatpush1.bf16.msra.mxu0 %v484
    %1333 = vmatprep.subr.bf16.mxu0 %v481
    %1334 = vmatpush1.bf16.msra.mxu0 %v480
    %1335 = vmatprep.subr.bf16.mxu0 %v477
    %1336 = vmatpush1.bf16.msra.mxu0 %v476
    %1337 = vmatprep.subr.bf16.mxu0 0
    %1338 = vmatpush2.bf16.msra.mxu0 0
    %1339 = vmatprep.subr.bf16.mxu0 0
    %1340 = vmatpush2.bf16.msra.mxu0 0
    %1341 = vmatprep.subr.bf16.mxu0 0
    %1342 = vmatpush2.bf16.msra.mxu0 0
    %1343 = vmatprep.subr.bf16.mxu0 0
    %1344 = vmatpush2.bf16.msra.mxu0 0
    %1345 = vmatprep.subr.bf16.mxu0 0
    %1346 = vmatpush2.bf16.msra.mxu0 0
    %1347 = vmatprep.subr.bf16.mxu0 0
    %1348 = vmatpush2.bf16.msra.mxu0 0
    %1349 = vmatprep.subr.bf16.mxu0 0
    %1350 = vmatpush2.bf16.msra.mxu0 0
    %1351 = vmatprep.subr.bf16.mxu0 0
    %1352 = vmatpush2.bf16.msra.mxu0 0
    %1353 = vmatprep.mubr.bf16.mxu0 0
    %1354 = vmatmul.mubr.bf16.gmra.mxu0 %v1320
    %v1355 = vpop.f32.mrf.mxu0
    %v1356 = vadd.f32 0.0, %v1355
    %v1357 = vpop.f32.mrf.mxu0
    %v1358 = vadd.f32 0.0, %v1357
    %v1359 = vpop.f32.mrf.mxu0
    %v1360 = vpop.f32.mrf.mxu0
    %1361 = vdwg.mxu0
    %1362 = vmatprep.subr.bf16.mxu0 %v507
    %1363 = vmatpush1.bf16.msra.mxu0 %v506
    %1364 = vmatprep.subr.bf16.mxu0 %v503
    %1365 = vmatpush1.bf16.msra.mxu0 %v502
    %1366 = vmatprep.subr.bf16.mxu0 %v499
    %1367 = vmatpush1.bf16.msra.mxu0 %v498
    %1368 = vmatprep.subr.bf16.mxu0 %v495
    %1369 = vmatpush1.bf16.msra.mxu0 %v494
    %1370 = vmatprep.subr.bf16.mxu0 %v491
    %1371 = vmatpush1.bf16.msra.mxu0 %v490
    %1372 = vmatprep.subr.bf16.mxu0 %v487
    %1373 = vmatpush1.bf16.msra.mxu0 %v486
    %1374 = vmatprep.subr.bf16.mxu0 %v483
    %1375 = vmatpush1.bf16.msra.mxu0 %v482
    %1376 = vmatprep.subr.bf16.mxu0 %v479
    %1377 = vmatpush1.bf16.msra.mxu0 %v478
    %1378 = vmatprep.subr.bf16.mxu0 0
    %1379 = vmatpush2.bf16.msra.mxu0 0
    %1380 = vmatprep.subr.bf16.mxu0 0
    %1381 = vmatpush2.bf16.msra.mxu0 0
    %1382 = vmatprep.subr.bf16.mxu0 0
    %1383 = vmatpush2.bf16.msra.mxu0 0
    %1384 = vmatprep.subr.bf16.mxu0 0
    %1385 = vmatpush2.bf16.msra.mxu0 0
    %1386 = vmatprep.subr.bf16.mxu0 0
    %1387 = vmatpush2.bf16.msra.mxu0 0
    %1388 = vmatprep.subr.bf16.mxu0 0
    %1389 = vmatpush2.bf16.msra.mxu0 0
    %1390 = vmatprep.subr.bf16.mxu0 0
    %1391 = vmatpush2.bf16.msra.mxu0 0
    %1392 = vmatprep.subr.bf16.mxu0 0
    %1393 = vmatpush2.bf16.msra.mxu0 0
    %1394 = vmatprep.mubr.bf16.mxu0 0
    %1395 = vmatmul.mubr.bf16.gmra.mxu0 %v1320
    %v1396 = vpop.f32.mrf.mxu0
    %v1397 = vadd.f32 0.0, %v1396
    %v1398 = vpop.f32.mrf.mxu0
    %v1399 = vadd.f32 0.0, %v1398
    %v1400 = vpop.f32.mrf.mxu0
    %v1401 = vpop.f32.mrf.mxu0
    %1402 = vdwg.mxu0
    %v1403 = vadd.f32 %v1316, %v1356
    %v1404 = vadd.f32 %v1317, %v1358
    %v1405 = vadd.f32 %v1318, %v1397
    %v1406 = vadd.f32 %v1319, %v1399
    %v1407 = vxor.u32 %v1403, 2147483648
    %v1408 = vxor.u32 %v1404, 2147483648
    %v1409 = vxor.u32 %v1405, 2147483648
    %v1410 = vmul.f32 %v1407, 1.442695
    %v1411 = vpow.pop %v1410
    %v1412 = vmul.f32 %v1408, 1.442695
    %v1413 = vpow.pop %v1412
    %v1414 = vmul.f32 %v1409, 1.442695
    %v1415 = vpow.pop %v1414
    %v1416 = vadd.f32 %v1411, 1.0
    %v1417 = vadd.f32 %v1413, 1.0
    %v1418 = vadd.f32 %v1415, 1.0
    %v1419 = vrcp.pop %v1416
    %v1420 = vmul.f32 1.0, %v1419
    %v1421 = vrcp.pop %v1417
    %v1422 = vmul.f32 1.0, %v1421
    %v1423 = vrcp.pop %v1418
    %v1424 = vmul.f32 1.0, %v1423
    %v1425 = vtanh.pop %v1406
    %v1426 = vmul.f32 %v1422, %v1273
    %v1427 = vmul.f32 %v1420, %v1425
    %v1428 = vadd.f32 %v1426, %v1427
    %v1429 = vtanh.pop %v1428
    %v1430 = vmul.f32 %v1424, %v1429
    %vm1431 = vcmp.gt.s32.totalorder %v372, 5
    %v1432 = vsel %vm1431, 1, 0
    %v1433 = vcvt.s32.f32 %v1432
    %1435 = vset.pattern.permute.xlu0 0
    %1436 = vperm.xlu0 %1435, %v1433
    %v1437 = vpop.permute.xlu0 %1436
    %v1439 = vmul.f32 %v1430, %v1437
    %v1440 = vmul.f32 %v1439, %v663
    %1441 = vadd.xlane.f32.xlu0 %v1440
    %v1442 = vpop.xlane.xlu0 %1441
    %v1443 = vsub.f32 1.0, %v1433
    %v1444 = vmul.f32 %v1443, 1e+08
    %v1445 = vsub.f32 %v1442, %v1444
    %v1446 = vmax.f32 %v1291, %v1445
    %v1447 = vsub.f32 %v1291, %v1446
    %v1448 = vmul.f32 %v1447, 1.442695
    %v1449 = vpow.pop %v1448
    %v1450 = vsub.f32 %v1445, %v1446
    %v1451 = vmul.f32 %v1450, 1.442695
    %v1452 = vpow.pop %v1451
    %v1453 = vmul.f32 %v1449, %v1299
    %v1454 = vadd.f32 %v1453, %v1452
    %1456 = vset.pattern.permute.xlu0 0
    %1457 = vperm.xlu0 %1456, %v1449
    %v1458 = vpop.permute.xlu0 %1457
    %v1460 = vmul.f32 %v1458, %v1312
    %1462 = vset.pattern.permute.xlu0 0
    %1463 = vperm.xlu0 %1462, %v1452
    %v1464 = vpop.permute.xlu0 %1463
    %v1466 = vmul.f32 %v1464, %v1439
    %v1467 = vadd.f32 %v1460, %v1466
    %s1468 = smul.u32 6, 4
    %s1469 = smul.addr %s1468, 8
    %s1470 = scalar_lea.vmem [#allocation2], %s1469
    %v1471 = vld [vmem:[%s1470] sm:$0xff]
    %v1472 = vld [vmem:[%s1470 + $0x8] sm:$0xff]
    %v1473 = vld [vmem:[%s1470 + $0x10] sm:$0xff]
    %v1474 = vld [vmem:[%s1470 + $0x18] sm:$0xff]
    %v1475 = vpack.c.bf16 %v1430, %v1430
    %1476 = vmatprep.subr.bf16.mxu0 %v505
    %1477 = vmatpush1.bf16.msra.mxu0 %v504
    %1478 = vmatprep.subr.bf16.mxu0 %v501
    %1479 = vmatpush1.bf16.msra.mxu0 %v500
    %1480 = vmatprep.subr.bf16.mxu0 %v497
    %1481 = vmatpush1.bf16.msra.mxu0 %v496
    %1482 = vmatprep.subr.bf16.mxu0 %v493
    %1483 = vmatpush1.bf16.msra.mxu0 %v492
    %1484 = vmatprep.subr.bf16.mxu0 %v489
    %1485 = vmatpush1.bf16.msra.mxu0 %v488
    %1486 = vmatprep.subr.bf16.mxu0 %v485
    %1487 = vmatpush1.bf16.msra.mxu0 %v484
    %1488 = vmatprep.subr.bf16.mxu0 %v481
    %1489 = vmatpush1.bf16.msra.mxu0 %v480
    %1490 = vmatprep.subr.bf16.mxu0 %v477
    %1491 = vmatpush1.bf16.msra.mxu0 %v476
    %1492 = vmatprep.subr.bf16.mxu0 0
    %1493 = vmatpush2.bf16.msra.mxu0 0
    %1494 = vmatprep.subr.bf16.mxu0 0
    %1495 = vmatpush2.bf16.msra.mxu0 0
    %1496 = vmatprep.subr.bf16.mxu0 0
    %1497 = vmatpush2.bf16.msra.mxu0 0
    %1498 = vmatprep.subr.bf16.mxu0 0
    %1499 = vmatpush2.bf16.msra.mxu0 0
    %1500 = vmatprep.subr.bf16.mxu0 0
    %1501 = vmatpush2.bf16.msra.mxu0 0
    %1502 = vmatprep.subr.bf16.mxu0 0
    %1503 = vmatpush2.bf16.msra.mxu0 0
    %1504 = vmatprep.subr.bf16.mxu0 0
    %1505 = vmatpush2.bf16.msra.mxu0 0
    %1506 = vmatprep.subr.bf16.mxu0 0
    %1507 = vmatpush2.bf16.msra.mxu0 0
    %1508 = vmatprep.mubr.bf16.mxu0 0
    %1509 = vmatmul.mubr.bf16.gmra.mxu0 %v1475
    %v1510 = vpop.f32.mrf.mxu0
    %v1511 = vadd.f32 0.0, %v1510
    %v1512 = vpop.f32.mrf.mxu0
    %v1513 = vadd.f32 0.0, %v1512
    %v1514 = vpop.f32.mrf.mxu0
    %v1515 = vpop.f32.mrf.mxu0
    %1516 = vdwg.mxu0
    %1517 = vmatprep.subr.bf16.mxu0 %v507
    %1518 = vmatpush1.bf16.msra.mxu0 %v506
    %1519 = vmatprep.subr.bf16.mxu0 %v503
    %1520 = vmatpush1.bf16.msra.mxu0 %v502
    %1521 = vmatprep.subr.bf16.mxu0 %v499
    %1522 = vmatpush1.bf16.msra.mxu0 %v498
    %1523 = vmatprep.subr.bf16.mxu0 %v495
    %1524 = vmatpush1.bf16.msra.mxu0 %v494
    %1525 = vmatprep.subr.bf16.mxu0 %v491
    %1526 = vmatpush1.bf16.msra.mxu0 %v490
    %1527 = vmatprep.subr.bf16.mxu0 %v487
    %1528 = vmatpush1.bf16.msra.mxu0 %v486
    %1529 = vmatprep.subr.bf16.mxu0 %v483
    %1530 = vmatpush1.bf16.msra.mxu0 %v482
    %1531 = vmatprep.subr.bf16.mxu0 %v479
    %1532 = vmatpush1.bf16.msra.mxu0 %v478
    %1533 = vmatprep.subr.bf16.mxu0 0
    %1534 = vmatpush2.bf16.msra.mxu0 0
    %1535 = vmatprep.subr.bf16.mxu0 0
    %1536 = vmatpush2.bf16.msra.mxu0 0
    %1537 = vmatprep.subr.bf16.mxu0 0
    %1538 = vmatpush2.bf16.msra.mxu0 0
    %1539 = vmatprep.subr.bf16.mxu0 0
    %1540 = vmatpush2.bf16.msra.mxu0 0
    %1541 = vmatprep.subr.bf16.mxu0 0
    %1542 = vmatpush2.bf16.msra.mxu0 0
    %1543 = vmatprep.subr.bf16.mxu0 0
    %1544 = vmatpush2.bf16.msra.mxu0 0
    %1545 = vmatprep.subr.bf16.mxu0 0
    %1546 = vmatpush2.bf16.msra.mxu0 0
    %1547 = vmatprep.subr.bf16.mxu0 0
    %1548 = vmatpush2.bf16.msra.mxu0 0
    %1549 = vmatprep.mubr.bf16.mxu0 0
    %1550 = vmatmul.mubr.bf16.gmra.mxu0 %v1475
    %v1551 = vpop.f32.mrf.mxu0
    %v1552 = vadd.f32 0.0, %v1551
    %v1553 = vpop.f32.mrf.mxu0
    %v1554 = vadd.f32 0.0, %v1553
    %v1555 = vpop.f32.mrf.mxu0
    %v1556 = vpop.f32.mrf.mxu0
    %1557 = vdwg.mxu0
    %v1558 = vadd.f32 %v1471, %v1511
    %v1559 = vadd.f32 %v1472, %v1513
    %v1560 = vadd.f32 %v1473, %v1552
    %v1561 = vadd.f32 %v1474, %v1554
    %v1562 = vxor.u32 %v1558, 2147483648
    %v1563 = vxor.u32 %v1559, 2147483648
    %v1564 = vxor.u32 %v1560, 2147483648
    %v1565 = vmul.f32 %v1562, 1.442695
    %v1566 = vpow.pop %v1565
    %v1567 = vmul.f32 %v1563, 1.442695
    %v1568 = vpow.pop %v1567
    %v1569 = vmul.f32 %v1564, 1.442695
    %v1570 = vpow.pop %v1569
    %v1571 = vadd.f32 %v1566, 1.0
    %v1572 = vadd.f32 %v1568, 1.0
    %v1573 = vadd.f32 %v1570, 1.0
    %v1574 = vrcp.pop %v1571
    %v1575 = vmul.f32 1.0, %v1574
    %v1576 = vrcp.pop %v1572
    %v1577 = vmul.f32 1.0, %v1576
    %v1578 = vrcp.pop %v1573
    %v1579 = vmul.f32 1.0, %v1578
    %v1580 = vtanh.pop %v1561
    %v1581 = vmul.f32 %v1577, %v1428
    %v1582 = vmul.f32 %v1575, %v1580
    %v1583 = vadd.f32 %v1581, %v1582
    %v1584 = vtanh.pop %v1583
    %v1585 = vmul.f32 %v1579, %v1584
    %vm1586 = vcmp.gt.s32.totalorder %v372, 6
    %v1587 = vsel %vm1586, 1, 0
    %v1588 = vcvt.s32.f32 %v1587
    %1590 = vset.pattern.permute.xlu0 0
    %1591 = vperm.xlu0 %1590, %v1588
    %v1592 = vpop.permute.xlu0 %1591
    %v1594 = vmul.f32 %v1585, %v1592
    %v1595 = vmul.f32 %v1594, %v663
    %1596 = vadd.xlane.f32.xlu0 %v1595
    %v1597 = vpop.xlane.xlu0 %1596
    %v1598 = vsub.f32 1.0, %v1588
    %v1599 = vmul.f32 %v1598, 1e+08
    %v1600 = vsub.f32 %v1597, %v1599
    %v1601 = vmax.f32 %v1446, %v1600
    %v1602 = vsub.f32 %v1446, %v1601
    %v1603 = vmul.f32 %v1602, 1.442695
    %v1604 = vpow.pop %v1603
    %v1605 = vsub.f32 %v1600, %v1601
    %v1606 = vmul.f32 %v1605, 1.442695
    %v1607 = vpow.pop %v1606
    %v1608 = vmul.f32 %v1604, %v1454
    %v1609 = vadd.f32 %v1608, %v1607
    %1611 = vset.pattern.permute.xlu0 0
    %1612 = vperm.xlu0 %1611, %v1604
    %v1613 = vpop.permute.xlu0 %1612
    %v1615 = vmul.f32 %v1613, %v1467
    %1617 = vset.pattern.permute.xlu0 0
    %1618 = vperm.xlu0 %1617, %v1607
    %v1619 = vpop.permute.xlu0 %1618
    %v1621 = vmul.f32 %v1619, %v1594
    %v1622 = vadd.f32 %v1615, %v1621
    %s1623 = smul.u32 7, 4
    %s1624 = smul.addr %s1623, 8
    %s1625 = scalar_lea.vmem [#allocation2], %s1624
    %v1626 = vld [vmem:[%s1625] sm:$0xff]
    %v1627 = vld [vmem:[%s1625 + $0x8] sm:$0xff]
    %v1628 = vld [vmem:[%s1625 + $0x10] sm:$0xff]
    %v1629 = vld [vmem:[%s1625 + $0x18] sm:$0xff]
    %v1630 = vpack.c.bf16 %v1585, %v1585
    %1631 = vmatprep.subr.bf16.mxu0 %v505
    %1632 = vmatpush1.bf16.msra.mxu0 %v504
    %1633 = vmatprep.subr.bf16.mxu0 %v501
    %1634 = vmatpush1.bf16.msra.mxu0 %v500
    %1635 = vmatprep.subr.bf16.mxu0 %v497
    %1636 = vmatpush1.bf16.msra.mxu0 %v496
    %1637 = vmatprep.subr.bf16.mxu0 %v493
    %1638 = vmatpush1.bf16.msra.mxu0 %v492
    %1639 = vmatprep.subr.bf16.mxu0 %v489
    %1640 = vmatpush1.bf16.msra.mxu0 %v488
    %1641 = vmatprep.subr.bf16.mxu0 %v485
    %1642 = vmatpush1.bf16.msra.mxu0 %v484
    %1643 = vmatprep.subr.bf16.mxu0 %v481
    %1644 = vmatpush1.bf16.msra.mxu0 %v480
    %1645 = vmatprep.subr.bf16.mxu0 %v477
    %1646 = vmatpush1.bf16.msra.mxu0 %v476
    %1647 = vmatprep.subr.bf16.mxu0 0
    %1648 = vmatpush2.bf16.msra.mxu0 0
    %1649 = vmatprep.subr.bf16.mxu0 0
    %1650 = vmatpush2.bf16.msra.mxu0 0
    %1651 = vmatprep.subr.bf16.mxu0 0
    %1652 = vmatpush2.bf16.msra.mxu0 0
    %1653 = vmatprep.subr.bf16.mxu0 0
    %1654 = vmatpush2.bf16.msra.mxu0 0
    %1655 = vmatprep.subr.bf16.mxu0 0
    %1656 = vmatpush2.bf16.msra.mxu0 0
    %1657 = vmatprep.subr.bf16.mxu0 0
    %1658 = vmatpush2.bf16.msra.mxu0 0
    %1659 = vmatprep.subr.bf16.mxu0 0
    %1660 = vmatpush2.bf16.msra.mxu0 0
    %1661 = vmatprep.subr.bf16.mxu0 0
    %1662 = vmatpush2.bf16.msra.mxu0 0
    %1663 = vmatprep.mubr.bf16.mxu0 0
    %1664 = vmatmul.mubr.bf16.gmra.mxu0 %v1630
    %v1665 = vpop.f32.mrf.mxu0
    %v1666 = vadd.f32 0.0, %v1665
    %v1667 = vpop.f32.mrf.mxu0
    %v1668 = vadd.f32 0.0, %v1667
    %v1669 = vpop.f32.mrf.mxu0
    %v1670 = vpop.f32.mrf.mxu0
    %1671 = vdwg.mxu0
    %1672 = vmatprep.subr.bf16.mxu0 %v507
    %1673 = vmatpush1.bf16.msra.mxu0 %v506
    %1674 = vmatprep.subr.bf16.mxu0 %v503
    %1675 = vmatpush1.bf16.msra.mxu0 %v502
    %1676 = vmatprep.subr.bf16.mxu0 %v499
    %1677 = vmatpush1.bf16.msra.mxu0 %v498
    %1678 = vmatprep.subr.bf16.mxu0 %v495
    %1679 = vmatpush1.bf16.msra.mxu0 %v494
    %1680 = vmatprep.subr.bf16.mxu0 %v491
    %1681 = vmatpush1.bf16.msra.mxu0 %v490
    %1682 = vmatprep.subr.bf16.mxu0 %v487
    %1683 = vmatpush1.bf16.msra.mxu0 %v486
    %1684 = vmatprep.subr.bf16.mxu0 %v483
    %1685 = vmatpush1.bf16.msra.mxu0 %v482
    %1686 = vmatprep.subr.bf16.mxu0 %v479
    %1687 = vmatpush1.bf16.msra.mxu0 %v478
    %1688 = vmatprep.subr.bf16.mxu0 0
    %1689 = vmatpush2.bf16.msra.mxu0 0
    %1690 = vmatprep.subr.bf16.mxu0 0
    %1691 = vmatpush2.bf16.msra.mxu0 0
    %1692 = vmatprep.subr.bf16.mxu0 0
    %1693 = vmatpush2.bf16.msra.mxu0 0
    %1694 = vmatprep.subr.bf16.mxu0 0
    %1695 = vmatpush2.bf16.msra.mxu0 0
    %1696 = vmatprep.subr.bf16.mxu0 0
    %1697 = vmatpush2.bf16.msra.mxu0 0
    %1698 = vmatprep.subr.bf16.mxu0 0
    %1699 = vmatpush2.bf16.msra.mxu0 0
    %1700 = vmatprep.subr.bf16.mxu0 0
    %1701 = vmatpush2.bf16.msra.mxu0 0
    %1702 = vmatprep.subr.bf16.mxu0 0
    %1703 = vmatpush2.bf16.msra.mxu0 0
    %1704 = vmatprep.mubr.bf16.mxu0 0
    %1705 = vmatmul.mubr.bf16.gmra.mxu0 %v1630
    %v1706 = vpop.f32.mrf.mxu0
    %v1707 = vadd.f32 0.0, %v1706
    %v1708 = vpop.f32.mrf.mxu0
    %v1709 = vadd.f32 0.0, %v1708
    %v1710 = vpop.f32.mrf.mxu0
    %v1711 = vpop.f32.mrf.mxu0
    %1712 = vdwg.mxu0
    %v1713 = vadd.f32 %v1626, %v1666
    %v1714 = vadd.f32 %v1627, %v1668
    %v1715 = vadd.f32 %v1628, %v1707
    %v1716 = vadd.f32 %v1629, %v1709
    %v1717 = vxor.u32 %v1713, 2147483648
    %v1718 = vxor.u32 %v1714, 2147483648
    %v1719 = vxor.u32 %v1715, 2147483648
    %v1720 = vmul.f32 %v1717, 1.442695
    %v1721 = vpow.pop %v1720
    %v1722 = vmul.f32 %v1718, 1.442695
    %v1723 = vpow.pop %v1722
    %v1724 = vmul.f32 %v1719, 1.442695
    %v1725 = vpow.pop %v1724
    %v1726 = vadd.f32 %v1721, 1.0
    %v1727 = vadd.f32 %v1723, 1.0
    %v1728 = vadd.f32 %v1725, 1.0
    %v1729 = vrcp.pop %v1726
    %v1730 = vmul.f32 1.0, %v1729
    %v1731 = vrcp.pop %v1727
    %v1732 = vmul.f32 1.0, %v1731
    %v1733 = vrcp.pop %v1728
    %v1734 = vmul.f32 1.0, %v1733
    %v1735 = vtanh.pop %v1716
    %v1736 = vmul.f32 %v1732, %v1583
    %v1737 = vmul.f32 %v1730, %v1735
    %v1738 = vadd.f32 %v1736, %v1737
    %v1739 = vtanh.pop %v1738
    %v1740 = vmul.f32 %v1734, %v1739
    %vm1741 = vcmp.gt.s32.totalorder %v372, 7
    %v1742 = vsel %vm1741, 1, 0
    %v1743 = vcvt.s32.f32 %v1742
    %1745 = vset.pattern.permute.xlu0 0
    %1746 = vperm.xlu0 %1745, %v1743
    %v1747 = vpop.permute.xlu0 %1746
    %v1749 = vmul.f32 %v1740, %v1747
    %v1750 = vmul.f32 %v1749, %v663
    %1751 = vadd.xlane.f32.xlu0 %v1750
    %v1752 = vpop.xlane.xlu0 %1751
    %v1753 = vsub.f32 1.0, %v1743
    %v1754 = vmul.f32 %v1753, 1e+08
    %v1755 = vsub.f32 %v1752, %v1754
    %v1756 = vmax.f32 %v1601, %v1755
    %v1757 = vsub.f32 %v1601, %v1756
    %v1758 = vmul.f32 %v1757, 1.442695
    %v1759 = vpow.pop %v1758
    %v1760 = vsub.f32 %v1755, %v1756
    %v1761 = vmul.f32 %v1760, 1.442695
    %v1762 = vpow.pop %v1761
    %v1763 = vmul.f32 %v1759, %v1609
    %v1764 = vadd.f32 %v1763, %v1762
    %1766 = vset.pattern.permute.xlu0 0
    %1767 = vperm.xlu0 %1766, %v1759
    %v1768 = vpop.permute.xlu0 %1767
    %v1770 = vmul.f32 %v1768, %v1622
    %1772 = vset.pattern.permute.xlu0 0
    %1773 = vperm.xlu0 %1772, %v1762
    %v1774 = vpop.permute.xlu0 %1773
    %v1776 = vmul.f32 %v1774, %v1749
    %v1777 = vadd.f32 %v1770, %v1776
    %v1778 = vrcp.pop %v1764
    %1780 = vset.pattern.permute.xlu0 0
    %1781 = vperm.xlu0 %1780, %v1778
    %v1782 = vpop.permute.xlu0 %1781
    %v1784 = vmul.f32 %v1777, %v1782
    %1785 = vst [vmem:[#allocation9] sm:$0xff] %v1784
    // Predicated region
    $region38: #{tpu_custom_call.1} parent=1 // pred_check
      _
    $region39: #{tpu_custom_call.1} parent=1 // pred_check_branch
      %1787 = sbr.rel (0) target = $region41
    $region40: #{tpu_custom_call.1} parent=1 // pred_region
      %s1789 = ssub.s32 128, 128
      %1790 = vsyncadd [#allocation5], %s1789
      %s1792 = sshll.u32 [#allocation9], 4
      %s1793 = int_to_ptr.vmem [resolvable:$true] %s1792
      %1795 = dma.vmem_to_hbm [thread:$0]  %s1793, 128, %s6, [#allocation5]
    $region41: #{tpu_custom_call.1} parent=1 // pred_fallthru
      _
    // Predicated region
    $region42: #{tpu_custom_call.1} parent=1 // pred_check
      _
    $region43: #{tpu_custom_call.1} parent=1 // pred_check_branch
      %1797 = sbr.rel (0) target = $region45
    $region44: #{tpu_custom_call.1} parent=1 // pred_region
      %1798 = dma.done [#allocation5], 128
    $region45: #{tpu_custom_call.1} parent=1 // pred_fallthru
      _
    %1799 = vsyncpa [#allocation4], 1
    %1800 = vsyncpa [#allocation7], 1
    %1801 = vsyncpa [#allocation5], 1

</llo_original>
